<compile_context>
chip_gen: v7x
topology: tpu7x:2x2x1
jax: 0.10.0
libtpu: 0.0.40
codegen_flags: <defaults>
</compile_context>

<pallas_src>
import functools

import jax
import jax.numpy as jnp
from jax.experimental import pallas as pl
from jax.experimental.pallas import tpu as pltpu

EPS = 1e-12  # F.normalize default eps

# (fan_in, fan_out) of the PyTorch Linear layers.
DIMS = ((80, 300), (300, 500), (500, 300), (300, 1))
# Kernel-side widths: fan-in of layer 1 stays 80 (no HBM pad); hidden widths are
# lane-aligned; final fan-out padded to 128 so the last matmul is MXU-friendly.
PAD_IN = {80: 80, 300: 384, 500: 512}
PAD_OUT = {300: 384, 500: 512, 1: 128}


def _round_up(n, m):
    return ((n + m - 1) // m) * m


def _bf16_elementwise_ok():
    """bf16 VPU exists on v6e/v7x; v5e and older would emulate it (slower)."""
    try:
        kind = jax.devices()[0].device_kind.lower()
    except Exception:
        return False
    return not any(tag in kind for tag in ("v2", "v3", "v4", "v5"))


def xanathor_kernel(x_ref, w1_ref, b1_ref, w2_ref, b2_ref,
                    w3_ref, b3_ref, w4_ref, b4_ref, o_ref, *, bf16_epilogue):
    x = x_ref[...]                                   # (tile_b, 80) f32, un-padded
    tb, f = x.shape

    # --- F.normalize(x, p=2, dim=1): per-(batch, channel) L2 over the 40 rows.
    # Flattened column j belongs to channel j % 2.
    col = jax.lax.broadcasted_iota(jnp.int32, (tb, f), 1)
    even = (col % 2) == 0
    sq = x * x
    s_tot = jnp.sum(sq, axis=1, keepdims=True)                         # (tb, 1)
    s_even = jnp.sum(jnp.where(even, sq, 0.0), axis=1, keepdims=True)  # (tb, 1)
    s_odd = s_tot - s_even
    # 1 / max(||x||, eps) == rsqrt(max(||x||^2, eps^2)); one EUP op per channel.
    inv_e = jax.lax.rsqrt(jnp.maximum(s_even, EPS * EPS))
    inv_o = jax.lax.rsqrt(jnp.maximum(s_odd, EPS * EPS))
    xn = x * jnp.where(even, inv_e, inv_o)                             # f32

    # --- hidden layers: bf16 MXU operands, f32 accumulation.
    def hidden(h_bf16, w_ref, b_ref):
        acc = jnp.dot(h_bf16, w_ref[...], preferred_element_type=jnp.float32)
        if bf16_epilogue:
            # v6e/v7x: bias + ReLU in bf16 (half the VPU ops / vreg pressure).
            hb = acc.astype(jnp.bfloat16) + b_ref[...].astype(jnp.bfloat16)
            return jnp.maximum(hb, 0)
        # v5e-safe: f32 elementwise, single cast back to bf16 for the next MXU op.
        return jnp.maximum(acc + b_ref[...], 0.0).astype(jnp.bfloat16)

    h = hidden(xn.astype(jnp.bfloat16), w1_ref, b1_ref)
    h = hidden(h, w2_ref, b2_ref)
    h = hidden(h, w3_ref, b3_ref)

    # Final layer: f32 accumulate + f32 bias; only lane 0 is real, so only a
    # 1-wide column is stored (tiny HBM writeback; wrapper squeezes it).
    out = jnp.dot(h, w4_ref[...], preferred_element_type=jnp.float32) + b4_ref[...]
    o_ref[...] = out[:, 0:1]


def make_params(key):
    """Deterministic init matching the PyTorch Linear shapes (f32, unpadded).

    Weights are stored as (in, out) so the math is x @ W + b (== x @ W.T + b
    with PyTorch's (out, in) storage).
    """
    params = []
    for i, (fi, fo) in enumerate(DIMS):
        kw, kb = jax.random.split(jax.random.fold_in(key, i))
        bound = 1.0 / jnp.sqrt(jnp.float32(fi))
        w = jax.random.uniform(kw, (fi, fo), jnp.float32, -bound, bound)
        b = jax.random.uniform(kb, (fo,), jnp.float32, -bound, bound)
        params += [w, b]
    return tuple(params)


def prep_params(params):
    """Zero-pad to kernel widths; weights -> bf16, biases stay f32."""
    prepped = []
    for i, (fi, fo) in enumerate(DIMS):
        w, b = params[2 * i], params[2 * i + 1]
        fi_p, fo_p = PAD_IN[fi], PAD_OUT[fo]
        wp = jnp.zeros((fi_p, fo_p), jnp.float32).at[:fi, :fo].set(w)
        bp = jnp.zeros((1, fo_p), jnp.float32).at[0, :fo].set(b)
        prepped += [wp.astype(jnp.bfloat16), bp]
    return tuple(prepped)


@functools.partial(jax.jit, static_argnames=("tile_b",))
def xanathor_forward(x, prepped_params, tile_b=1024):
    B = x.shape[0]
    x_flat = x.reshape(B, -1).astype(jnp.float32)          # (B, 80), Flatten order
    F_in = x_flat.shape[1]

    # Tile sizing: multiple of 8, no bigger than needed, and keep >= 2 grid
    # steps when the batch allows it so both v7x TensorCores get work.
    b_ceil = _round_up(max(B, 8), 8)
    tile_b = max(8, min(_round_up(tile_b, 8), b_ceil))
    half = _round_up(-(-b_ceil // 2), 8)
    if b_ceil >= 16:
        tile_b = min(tile_b, half)
    B_pad = _round_up(B, tile_b)

    # Only pad the batch axis (zero rows normalize to zero -> no NaNs, discarded).
    x_p = x_flat if B_pad == B else (
        jnp.zeros((B_pad, F_in), jnp.float32).at[:B].set(x_flat))

    grid = (B_pad // tile_b,)
    x_spec = pl.BlockSpec((tile_b, F_in), lambda i: (i, 0))
    o_spec = pl.BlockSpec((tile_b, 1), lambda i: (i, 0))
    # Weights/biases: constant index_map -> DMA'd once, VMEM-resident.
    param_specs = [pl.BlockSpec(p.shape, lambda i: (0, 0)) for p in prepped_params]

    flops = 2 * B_pad * sum(PAD_IN[fi] * PAD_OUT[fo] for fi, fo in DIMS)
    bytes_accessed = (B_pad * F_in * 4 + B_pad * 4
                      + sum(int(p.size) * p.dtype.itemsize for p in prepped_params))
    cost = pl.CostEstimate(flops=flops, transcendentals=2 * B_pad,
                           bytes_accessed=bytes_accessed)

    kernel = functools.partial(xanathor_kernel,
                               bf16_epilogue=_bf16_elementwise_ok())

    out = pl.pallas_call(
        kernel,
        out_shape=jax.ShapeDtypeStruct((B_pad, 1), jnp.float32),
        grid=grid,
        in_specs=[x_spec] + param_specs,
        out_specs=o_spec,
        compiler_params=pltpu.CompilerParams(
            dimension_semantics=("parallel",),
            vmem_limit_bytes=32 * 1024 * 1024),
        cost_estimate=cost,
    )(x_p, *prepped_params)

    return jnp.squeeze(out[:B, :1])                        # matches torch .squeeze()


def reference_forward(x, params):
    """Pure-JAX f32 reference reproducing the PyTorch forward."""
    w1, b1, w2, b2, w3, b3, w4, b4 = params
    norm = jnp.sqrt(jnp.sum(x * x, axis=1, keepdims=True))  # over dim=1
    xn = x / jnp.maximum(norm, EPS)
    h = xn.reshape(x.shape[0], -1)
    h = jax.nn.relu(h @ w1 + b1)
    h = jax.nn.relu(h @ w2 + b2)
    h = jax.nn.relu(h @ w3 + b3)
    h = h @ w4 + b4
    return jnp.squeeze(h)


if __name__ == "__main__":
    key = jax.random.PRNGKey(0)
    kx, kp = jax.random.split(key)
    B = 8
    x = jax.random.normal(kx, (B, 40, 2), dtype=jnp.float32)

    params = make_params(kp)
    prepped = prep_params(params)

    out = xanathor_forward(x, prepped)
    out = jax.block_until_ready(out)

    ref = reference_forward(x, params)
    assert out.shape == (B,), out.shape
    # bf16 MXU operands (f32 accumulation) vs. the pure-f32 reference.
    assert jnp.allclose(out, ref, atol=3e-2, rtol=3e-2), (out, ref)
    print("KERNEL_OK")
</pallas_src>

<mosaic_0001>
module attributes {stable_mosaic.version = 11 : i64} {
  func.func @xanathor_kernel(%arg0: i32, %arg1: memref<8x80xf32, #tpu.memory_space<vmem>>, %arg2: memref<80x384xbf16, #tpu.memory_space<vmem>>, %arg3: memref<1x384xf32, #tpu.memory_space<vmem>>, %arg4: memref<384x512xbf16, #tpu.memory_space<vmem>>, %arg5: memref<1x512xf32, #tpu.memory_space<vmem>>, %arg6: memref<512x384xbf16, #tpu.memory_space<vmem>>, %arg7: memref<1x384xf32, #tpu.memory_space<vmem>>, %arg8: memref<384x128xbf16, #tpu.memory_space<vmem>>, %arg9: memref<1x128xf32, #tpu.memory_space<vmem>>, %arg10: memref<8x1xf32, #tpu.memory_space<vmem>>) attributes {dimension_semantics = [#tpu.dimension_semantics<parallel>], iteration_bounds = array<i64: 1>, scalar_prefetch = 0 : i64, scratch_operands = 0 : i64, tpu.core_type = #tpu.core_type<tc>, window_params = [{transform_indices = @transform_0, window_bounds = array<i64: 8, 80>}, {pipeline_mode = #tpu.pipeline_mode<synchronous>, transform_indices = @transform_1, window_bounds = array<i64: 80, 384>}, {pipeline_mode = #tpu.pipeline_mode<synchronous>, transform_indices = @transform_2, window_bounds = array<i64: 1, 384>}, {pipeline_mode = #tpu.pipeline_mode<synchronous>, transform_indices = @transform_3, window_bounds = array<i64: 384, 512>}, {pipeline_mode = #tpu.pipeline_mode<synchronous>, transform_indices = @transform_4, window_bounds = array<i64: 1, 512>}, {pipeline_mode = #tpu.pipeline_mode<synchronous>, transform_indices = @transform_5, window_bounds = array<i64: 512, 384>}, {pipeline_mode = #tpu.pipeline_mode<synchronous>, transform_indices = @transform_6, window_bounds = array<i64: 1, 384>}, {pipeline_mode = #tpu.pipeline_mode<synchronous>, transform_indices = @transform_7, window_bounds = array<i64: 384, 128>}, {pipeline_mode = #tpu.pipeline_mode<synchronous>, transform_indices = @transform_8, window_bounds = array<i64: 1, 128>}, {transform_indices = @transform_9, window_bounds = array<i64: 8, 1>}]} {
    %c0 = arith.constant 0 : index
    %c0_0 = arith.constant 0 : index
    %0 = vector.load %arg1[%c0, %c0_0] : memref<8x80xf32, #tpu.memory_space<vmem>>, vector<8x80xf32>
    %1 = tpu.iota {dimensions = array<i32: 1>} : vector<8x80xi32>
    %c2_i32 = arith.constant 2 : i32
    %c0_i32 = arith.constant 0 : i32
    %2 = arith.cmpi eq, %c2_i32, %c0_i32 : i32
    %c1_i32 = arith.constant 1 : i32
    %3 = arith.select %2, %c1_i32, %c2_i32 : i32
    %4 = vector.broadcast %3 : i32 to vector<8x80xi32>
    %5 = arith.remsi %1, %4 : vector<8x80xi32>
    %c0_i32_1 = arith.constant 0 : i32
    %6 = vector.broadcast %c0_i32_1 : i32 to vector<8x80xi32>
    %7 = arith.cmpi ne, %5, %6 : vector<8x80xi32>
    %c0_i32_2 = arith.constant 0 : i32
    %8 = vector.broadcast %c0_i32_2 : i32 to vector<8x80xi32>
    %9 = arith.cmpi slt, %5, %8 : vector<8x80xi32>
    %c0_i32_3 = arith.constant 0 : i32
    %10 = arith.cmpi slt, %3, %c0_i32_3 : i32
    %11 = vector.broadcast %10 : i1 to vector<8x80xi1>
    %12 = vector.broadcast %11 : vector<8x80xi1> to vector<8x80xi1>
    %13 = arith.xori %9, %12 : vector<8x80xi1>
    %14 = arith.andi %13, %7 : vector<8x80xi1>
    %15 = vector.broadcast %3 : i32 to vector<8x80xi32>
    %16 = arith.addi %5, %15 : vector<8x80xi32>
    %17 = arith.select %14, %16, %5 : vector<8x80xi1>, vector<8x80xi32>
    %c0_i32_4 = arith.constant 0 : i32
    %18 = vector.broadcast %c0_i32_4 : i32 to vector<8x80xi32>
    %19 = arith.cmpi eq, %17, %18 : vector<8x80xi32>
    %20 = arith.mulf %0, %0 : vector<8x80xf32>
    %cst = arith.constant dense<0.000000e+00> : vector<8xf32>
    %21 = vector.multi_reduction <add>, %20, %cst [1] : vector<8x80xf32> to vector<8xf32>
    %22 = vector.shape_cast %21 : vector<8xf32> to vector<8x1xf32>
    %cst_5 = arith.constant 0.000000e+00 : f32
    %23 = vector.broadcast %cst_5 : f32 to vector<8x80xf32>
    %24 = arith.select %19, %20, %23 : vector<8x80xi1>, vector<8x80xf32>
    %cst_6 = arith.constant dense<0.000000e+00> : vector<8xf32>
    %25 = vector.multi_reduction <add>, %24, %cst_6 [1] : vector<8x80xf32> to vector<8xf32>
    %26 = vector.shape_cast %25 : vector<8xf32> to vector<8x1xf32>
    %27 = arith.subf %22, %26 : vector<8x1xf32>
    %cst_7 = arith.constant 1.000000e-24 : f32
    %28 = vector.broadcast %cst_7 : f32 to vector<8x1xf32>
    %29 = arith.maximumf %26, %28 : vector<8x1xf32>
    %30 = math.rsqrt %29 : vector<8x1xf32>
    %cst_8 = arith.constant 1.000000e-24 : f32
    %31 = vector.broadcast %cst_8 : f32 to vector<8x1xf32>
    %32 = arith.maximumf %27, %31 : vector<8x1xf32>
    %33 = math.rsqrt %32 : vector<8x1xf32>
    %34 = vector.shape_cast %30 : vector<8x1xf32> to vector<8x1xf32>
    %35 = vector.broadcast %34 : vector<8x1xf32> to vector<8x80xf32>
    %36 = vector.shape_cast %33 : vector<8x1xf32> to vector<8x1xf32>
    %37 = vector.broadcast %36 : vector<8x1xf32> to vector<8x80xf32>
    %38 = arith.select %19, %35, %37 : vector<8x80xi1>, vector<8x80xf32>
    %39 = arith.mulf %0, %38 : vector<8x80xf32>
    %40 = arith.truncf %39 : vector<8x80xf32> to vector<8x80xbf16>
    %c0_9 = arith.constant 0 : index
    %c0_10 = arith.constant 0 : index
    %41 = vector.load %arg2[%c0_9, %c0_10] : memref<80x384xbf16, #tpu.memory_space<vmem>>, vector<80x384xbf16>
    %cst_11 = arith.constant dense<0.000000e+00> : vector<8x384xf32>
    %42 = tpu.matmul %40, %41, %cst_11 {dimension_numbers = #tpu.dot_dimension_numbers<[1], [0], [0], [1], [0, 0, 1, 1], [], []>} : vector<8x80xbf16>, vector<80x384xbf16>, vector<8x384xf32> -> vector<8x384xf32>
    %43 = arith.truncf %42 : vector<8x384xf32> to vector<8x384xbf16>
    %c0_12 = arith.constant 0 : index
    %c0_13 = arith.constant 0 : index
    %44 = vector.load %arg3[%c0_12, %c0_13] : memref<1x384xf32, #tpu.memory_space<vmem>>, vector<1x384xf32>
    %45 = arith.truncf %44 : vector<1x384xf32> to vector<1x384xbf16>
    %46 = vector.broadcast %45 : vector<1x384xbf16> to vector<8x384xbf16>
    %47 = arith.addf %43, %46 : vector<8x384xbf16>
    %cst_14 = arith.constant 0.000000e+00 : bf16
    %48 = vector.broadcast %cst_14 : bf16 to vector<8x384xbf16>
    %49 = arith.maximumf %47, %48 : vector<8x384xbf16>
    %c0_15 = arith.constant 0 : index
    %c0_16 = arith.constant 0 : index
    %50 = vector.load %arg4[%c0_15, %c0_16] : memref<384x512xbf16, #tpu.memory_space<vmem>>, vector<384x512xbf16>
    %cst_17 = arith.constant dense<0.000000e+00> : vector<8x512xf32>
    %51 = tpu.matmul %49, %50, %cst_17 {dimension_numbers = #tpu.dot_dimension_numbers<[1], [0], [0], [1], [0, 0, 1, 1], [], []>} : vector<8x384xbf16>, vector<384x512xbf16>, vector<8x512xf32> -> vector<8x512xf32>
    %52 = arith.truncf %51 : vector<8x512xf32> to vector<8x512xbf16>
    %c0_18 = arith.constant 0 : index
    %c0_19 = arith.constant 0 : index
    %53 = vector.load %arg5[%c0_18, %c0_19] : memref<1x512xf32, #tpu.memory_space<vmem>>, vector<1x512xf32>
    %54 = arith.truncf %53 : vector<1x512xf32> to vector<1x512xbf16>
    %55 = vector.broadcast %54 : vector<1x512xbf16> to vector<8x512xbf16>
    %56 = arith.addf %52, %55 : vector<8x512xbf16>
    %cst_20 = arith.constant 0.000000e+00 : bf16
    %57 = vector.broadcast %cst_20 : bf16 to vector<8x512xbf16>
    %58 = arith.maximumf %56, %57 : vector<8x512xbf16>
    %c0_21 = arith.constant 0 : index
    %c0_22 = arith.constant 0 : index
    %59 = vector.load %arg6[%c0_21, %c0_22] : memref<512x384xbf16, #tpu.memory_space<vmem>>, vector<512x384xbf16>
    %cst_23 = arith.constant dense<0.000000e+00> : vector<8x384xf32>
    %60 = tpu.matmul %58, %59, %cst_23 {dimension_numbers = #tpu.dot_dimension_numbers<[1], [0], [0], [1], [0, 0, 1, 1], [], []>} : vector<8x512xbf16>, vector<512x384xbf16>, vector<8x384xf32> -> vector<8x384xf32>
    %61 = arith.truncf %60 : vector<8x384xf32> to vector<8x384xbf16>
    %c0_24 = arith.constant 0 : index
    %c0_25 = arith.constant 0 : index
    %62 = vector.load %arg7[%c0_24, %c0_25] : memref<1x384xf32, #tpu.memory_space<vmem>>, vector<1x384xf32>
    %63 = arith.truncf %62 : vector<1x384xf32> to vector<1x384xbf16>
    %64 = vector.broadcast %63 : vector<1x384xbf16> to vector<8x384xbf16>
    %65 = arith.addf %61, %64 : vector<8x384xbf16>
    %cst_26 = arith.constant 0.000000e+00 : bf16
    %66 = vector.broadcast %cst_26 : bf16 to vector<8x384xbf16>
    %67 = arith.maximumf %65, %66 : vector<8x384xbf16>
    %c0_27 = arith.constant 0 : index
    %c0_28 = arith.constant 0 : index
    %68 = vector.load %arg8[%c0_27, %c0_28] : memref<384x128xbf16, #tpu.memory_space<vmem>>, vector<384x128xbf16>
    %cst_29 = arith.constant dense<0.000000e+00> : vector<8x128xf32>
    %69 = tpu.matmul %67, %68, %cst_29 {dimension_numbers = #tpu.dot_dimension_numbers<[1], [0], [0], [1], [0, 0, 1, 1], [], []>} : vector<8x384xbf16>, vector<384x128xbf16>, vector<8x128xf32> -> vector<8x128xf32>
    %c0_30 = arith.constant 0 : index
    %c0_31 = arith.constant 0 : index
    %70 = vector.load %arg9[%c0_30, %c0_31] : memref<1x128xf32, #tpu.memory_space<vmem>>, vector<1x128xf32>
    %71 = vector.broadcast %70 : vector<1x128xf32> to vector<8x128xf32>
    %72 = arith.addf %69, %71 : vector<8x128xf32>
    %73 = vector.extract_strided_slice %72 {offsets = [0, 0], sizes = [8, 1], strides = [1, 1]} : vector<8x128xf32> to vector<8x1xf32>
    %c0_32 = arith.constant 0 : index
    %c0_33 = arith.constant 0 : index
    %74 = vector.load %arg10[%c0_32, %c0_33] : memref<8x1xf32, #tpu.memory_space<vmem>>, vector<8x1xf32>
    tpu.vector_store %arg10[%c0_32, %c0_33], %73 {strides = array<i32>} : memref<8x1xf32, #tpu.memory_space<vmem>>, vector<8x1xf32>,
    return
  }
  func.func @transform_0(%arg0: i32) -> (i32, i32) {
    %c0_i32 = arith.constant 0 : i32
    %c0_i32_0 = arith.constant 0 : i32
    return %arg0, %c0_i32 : i32, i32
  }
  func.func @transform_1(%arg0: i32) -> (i32, i32) {
    %c0_i32 = arith.constant 0 : i32
    %c0_i32_0 = arith.constant 0 : i32
    %c0_i32_1 = arith.constant 0 : i32
    return %c0_i32, %c0_i32_0 : i32, i32
  }
  func.func @transform_2(%arg0: i32) -> (i32, i32) {
    %c0_i32 = arith.constant 0 : i32
    %c0_i32_0 = arith.constant 0 : i32
    %c0_i32_1 = arith.constant 0 : i32
    return %c0_i32, %c0_i32_0 : i32, i32
  }
  func.func @transform_3(%arg0: i32) -> (i32, i32) {
    %c0_i32 = arith.constant 0 : i32
    %c0_i32_0 = arith.constant 0 : i32
    %c0_i32_1 = arith.constant 0 : i32
    return %c0_i32, %c0_i32_0 : i32, i32
  }
  func.func @transform_4(%arg0: i32) -> (i32, i32) {
    %c0_i32 = arith.constant 0 : i32
    %c0_i32_0 = arith.constant 0 : i32
    %c0_i32_1 = arith.constant 0 : i32
    return %c0_i32, %c0_i32_0 : i32, i32
  }
  func.func @transform_5(%arg0: i32) -> (i32, i32) {
    %c0_i32 = arith.constant 0 : i32
    %c0_i32_0 = arith.constant 0 : i32
    %c0_i32_1 = arith.constant 0 : i32
    return %c0_i32, %c0_i32_0 : i32, i32
  }
  func.func @transform_6(%arg0: i32) -> (i32, i32) {
    %c0_i32 = arith.constant 0 : i32
    %c0_i32_0 = arith.constant 0 : i32
    %c0_i32_1 = arith.constant 0 : i32
    return %c0_i32, %c0_i32_0 : i32, i32
  }
  func.func @transform_7(%arg0: i32) -> (i32, i32) {
    %c0_i32 = arith.constant 0 : i32
    %c0_i32_0 = arith.constant 0 : i32
    %c0_i32_1 = arith.constant 0 : i32
    return %c0_i32, %c0_i32_0 : i32, i32
  }
  func.func @transform_8(%arg0: i32) -> (i32, i32) {
    %c0_i32 = arith.constant 0 : i32
    %c0_i32_0 = arith.constant 0 : i32
    %c0_i32_1 = arith.constant 0 : i32
    return %c0_i32, %c0_i32_0 : i32, i32
  }
  func.func @transform_9(%arg0: i32) -> (i32, i32) {
    %c0_i32 = arith.constant 0 : i32
    %c0_i32_0 = arith.constant 0 : i32
    return %arg0, %c0_i32 : i32, i32
  }
}

</mosaic_0001>

<llo_original>
// kernel: xanathor_forward.1
$region0: #{xanathor_forward.1}
  #allocation0 [shape = 'u32[]', space=smem, size = 0x4, offset = 0x4, fixed_abs, tag = 'smem constant byte address 0x4 - core index']
  #allocation1 [shape = 'u32[144,128]{1,0:T(1,128)}', space=vmem, size = 0x12000, scoped, tag = 'internal scratch']
  %s0 = inlined_call_operand.vmem [shape: f32[8,80], index: 0, kind: input, shape index: {}]
  %s1 = inlined_call_operand.hbm [shape: bf16[80,384], index: 1, kind: input, shape index: {}]
  %s2 = inlined_call_operand.vmem [shape: f32[1,384], index: 2, kind: input, shape index: {}]
  %s3 = inlined_call_operand.hbm [shape: bf16[384,512], index: 3, kind: input, shape index: {}]
  %s4 = inlined_call_operand.vmem [shape: f32[1,512], index: 4, kind: input, shape index: {}]
  %s5 = inlined_call_operand.hbm [shape: bf16[512,384], index: 5, kind: input, shape index: {}]
  %s6 = inlined_call_operand.vmem [shape: f32[1,384], index: 6, kind: input, shape index: {}]
  %s7 = inlined_call_operand.vmem [shape: bf16[384,128], index: 7, kind: input, shape index: {}]
  %s8 = inlined_call_operand.vmem [shape: f32[1,128], index: 8, kind: input, shape index: {}]
  %s9 = inlined_call_operand.vmem [shape: f32[8,1], index: 9, kind: output, shape index: {}]
  %s10 = sld [smem:[#allocation0]]
  $region58: #{xanathor_forward.1} parent=0
    _
  %s12 = ssub.s32 1, %s10
  %s13 = scalar_select 0, %s12, %s10
  $region1: #{xanathor_forward.1} parent=0
    #allocation2 [shape = 'u8[61440]{0}', space=vmem, size = 0xf000, scoped, tag = 'input window, operand 1, single buffered']
    #allocation3 [shape = 's32[1]{0}', space=sflag, size = 0x4, scoped, tag = 'scoped memory for xanathor_forward.1']
    #allocation4 [shape = 'u8[393216]{0}', space=vmem, size = 0x60000, scoped, tag = 'input window, operand 3, single buffered']
    #allocation5 [shape = 's32[1]{0}', space=sflag, size = 0x4, scoped, tag = 'scoped memory for xanathor_forward.1']
    #allocation6 [shape = 'u8[393216]{0}', space=vmem, size = 0x60000, scoped, tag = 'input window, operand 5, single buffered']
    %14 = vsyncpa [#allocation3], 0
    %15 = vsyncpa [#allocation5], 0
    // Predicated region
    $region2: #{xanathor_forward.1} parent=1 // pred_check
      _
    $region3: #{xanathor_forward.1} parent=1 // pred_check_branch
      %17 = sbr.rel (0) target = $region5
    $region4: #{xanathor_forward.1} parent=1 // pred_region
      _
    $region5: #{xanathor_forward.1} parent=1 // pred_fallthru
      _
    // Predicated region
    $region6: #{xanathor_forward.1} parent=1 // pred_check
      _
    $region7: #{xanathor_forward.1} parent=1 // pred_check_branch
      %19 = sbr.rel (0) target = $region9
    $region8: #{xanathor_forward.1} parent=1 // pred_region
      %s21 = ssub.s32 1920, 1920
      %22 = vsyncadd [#allocation3], %s21
      %s23 = sshll.u32 [#allocation2], 4
      %s24 = int_to_ptr.vmem [resolvable:$true] %s23
      %29 = dma.hbm_to_vmem [thread:$0]  %s1, 1920, %s24, [#allocation3], 192, 192, 12
    $region9: #{xanathor_forward.1} parent=1 // pred_fallthru
      _
    // Predicated region
    $region10: #{xanathor_forward.1} parent=1 // pred_check
      _
    $region11: #{xanathor_forward.1} parent=1 // pred_check_branch
      %31 = sbr.rel (0) target = $region13
    $region12: #{xanathor_forward.1} parent=1 // pred_region
      _
    $region13: #{xanathor_forward.1} parent=1 // pred_fallthru
      _
    // Predicated region
    $region14: #{xanathor_forward.1} parent=1 // pred_check
      _
    $region15: #{xanathor_forward.1} parent=1 // pred_check_branch
      %33 = sbr.rel (0) target = $region17
    $region16: #{xanathor_forward.1} parent=1 // pred_region
      %s35 = ssub.s32 12288, 12288
      %36 = vsyncadd [#allocation5], %s35
      %s37 = sshll.u32 [#allocation4], 4
      %s38 = int_to_ptr.vmem [resolvable:$true] %s37
      %43 = dma.hbm_to_vmem [thread:$0]  %s3, 12288, %s38, [#allocation5], 256, 256, 16
    $region17: #{xanathor_forward.1} parent=1 // pred_fallthru
      _
    // Predicated region
    $region18: #{xanathor_forward.1} parent=1 // pred_check
      _
    $region19: #{xanathor_forward.1} parent=1 // pred_check_branch
      %45 = sbr.rel (0) target = $region21
    $region20: #{xanathor_forward.1} parent=1 // pred_region
      _
    $region21: #{xanathor_forward.1} parent=1 // pred_fallthru
      _
    // Predicated region
    $region22: #{xanathor_forward.1} parent=1 // pred_check
      _
    $region23: #{xanathor_forward.1} parent=1 // pred_check_branch
      %47 = sbr.rel (0) target = $region25
    $region24: #{xanathor_forward.1} parent=1 // pred_region
      %s49 = ssub.s32 12288, 12288
      %50 = vsyncadd [#allocation5], %s49
      %s51 = sshll.u32 [#allocation6], 4
      %s52 = int_to_ptr.vmem [resolvable:$true] %s51
      %57 = dma.hbm_to_vmem [thread:$0]  %s5, 12288, %s52, [#allocation5], 192, 192, 12
    $region25: #{xanathor_forward.1} parent=1 // pred_fallthru
      _
    // Predicated region
    $region26: #{xanathor_forward.1} parent=1 // pred_check
      _
    $region27: #{xanathor_forward.1} parent=1 // pred_check_branch
      %59 = sbr.rel (0) target = $region29
    $region28: #{xanathor_forward.1} parent=1 // pred_region
      _
    $region29: #{xanathor_forward.1} parent=1 // pred_fallthru
      _
    // Predicated region
    $region30: #{xanathor_forward.1} parent=1 // pred_check
      _
    $region31: #{xanathor_forward.1} parent=1 // pred_check_branch
      %61 = sbr.rel (0) target = $region33
    $region32: #{xanathor_forward.1} parent=1 // pred_region
      _
    $region33: #{xanathor_forward.1} parent=1 // pred_fallthru
      _
    // Predicated region
    $region34: #{xanathor_forward.1} parent=1 // pred_check
      _
    $region35: #{xanathor_forward.1} parent=1 // pred_check_branch
      %63 = sbr.rel (0) target = $region37
    $region36: #{xanathor_forward.1} parent=1 // pred_region
      _
    $region37: #{xanathor_forward.1} parent=1 // pred_fallthru
      _
    // Predicated region
    $region38: #{xanathor_forward.1} parent=1 // pred_check
      _
    $region39: #{xanathor_forward.1} parent=1 // pred_check_branch
      %65 = sbr.rel (0) target = $region41
    $region40: #{xanathor_forward.1} parent=1 // pred_region
      %66 = dma.done [#allocation3], 1920
    $region41: #{xanathor_forward.1} parent=1 // pred_fallthru
      _
    // Predicated region
    $region42: #{xanathor_forward.1} parent=1 // pred_check
      _
    $region43: #{xanathor_forward.1} parent=1 // pred_check_branch
      %68 = sbr.rel (0) target = $region45
    $region44: #{xanathor_forward.1} parent=1 // pred_region
      %69 = dma.done [#allocation5], 12288
    $region45: #{xanathor_forward.1} parent=1 // pred_fallthru
      _
    // Predicated region
    $region46: #{xanathor_forward.1} parent=1 // pred_check
      _
    $region47: #{xanathor_forward.1} parent=1 // pred_check_branch
      %71 = sbr.rel (0) target = $region49
    $region48: #{xanathor_forward.1} parent=1 // pred_region
      %72 = dma.done [#allocation5], 12288
    $region49: #{xanathor_forward.1} parent=1 // pred_fallthru
      _
    %v74 = vld [vmem:[%s0] sm:$0xff]
    %v75 = vlaneseq
    %v76 = vand.u32 %v75, 127
    %vm77 = vcmp.lt.s32.totalorder %v76, 0
    %v78 = vsub.s32 0, %v76
    %v79 = vsel %vm77, %v78, %v76
    %v80 = vshrl.u32 %v79, 1
    %v81 = vand.u32 %v79, 1
    %v82 = vsub.s32 0, %v81
    %v83 = vsel %vm77, %v82, %v81
    %vm84 = vcmp.ne.s32.totalorder %v83, 0
    %vm85 = vcmp.lt.s32.totalorder %v83, 0
    %vm86 = vmand %vm85, %vm84
    %v87 = vadd.s32 %v83, 2
    %v88 = vsel %vm86, %v87, %v83
    %vm89 = vcmp.eq.s32.totalorder %v88, 0
    %v90 = vmul.f32 %v74, %v74
    %vm91 = vcmask 654336
    %v92 = vsel %vm91, %v90, 0.0
    %93 = vadd.xlane.f32.xlu0 %v92
    %v94 = vpop.xlane.xlu0 %93
    %v95 = vsel %vm89, %v90, 0.0
    %v96 = vsel %vm91, %v95, 0.0
    %97 = vadd.xlane.f32.xlu0 %v96
    %v98 = vpop.xlane.xlu0 %97
    %v99 = vsub.f32 %v94, %v98
    %v100 = vmax.f32 %v98, 1e-24
    %v101 = vrsqrt.pop %v100
    %v102 = vmax.f32 %v99, 1e-24
    %v103 = vrsqrt.pop %v102
    %v104 = vsel %vm89, %v101, %v103
    %v105 = vmul.f32 %v74, %v104
    %v106 = vpack.c.bf16 %v105, %v105
    %v107 = vld [vmem:[#allocation2] sm:$0xff]
    %v108 = vld [vmem:[#allocation2 + $0x8] sm:$0xf]
    %v109 = vld [vmem:[#allocation2 + $0xc] sm:$0xff]
    %v110 = vld [vmem:[#allocation2 + $0x14] sm:$0xf]
    %v111 = vld [vmem:[#allocation2 + $0x18] sm:$0xff]
    %v112 = vld [vmem:[#allocation2 + $0x20] sm:$0xf]
    %v113 = vld [vmem:[#allocation2 + $0x24] sm:$0xff]
    %v114 = vld [vmem:[#allocation2 + $0x2c] sm:$0xf]
    %v115 = vld [vmem:[#allocation2 + $0x30] sm:$0xff]
    %v116 = vld [vmem:[#allocation2 + $0x38] sm:$0xf]
    %v117 = vld [vmem:[#allocation2 + $0x3c] sm:$0xff]
    %v118 = vld [vmem:[#allocation2 + $0x44] sm:$0xf]
    %v119 = vld [vmem:[#allocation2 + $0x48] sm:$0xff]
    %v120 = vld [vmem:[#allocation2 + $0x50] sm:$0xf]
    %v121 = vld [vmem:[#allocation2 + $0x54] sm:$0xff]
    %v122 = vld [vmem:[#allocation2 + $0x5c] sm:$0xf]
    %v123 = vld [vmem:[#allocation2 + $0x60] sm:$0xff]
    %v124 = vld [vmem:[#allocation2 + $0x68] sm:$0xf]
    %v125 = vld [vmem:[#allocation2 + $0x6c] sm:$0xff]
    %v126 = vld [vmem:[#allocation2 + $0x74] sm:$0xf]
    %v147 = vunpack.c.l.b16 %v107
    %v148 = vunpack.c.h.b16 %v107
    %v149 = vunpack.c.l.b16 %v108
    %v150 = vunpack.c.l.b16 %v109
    %v151 = vunpack.c.h.b16 %v109
    %v152 = vunpack.c.l.b16 %v110
    %v153 = vunpack.c.l.b16 %v111
    %v154 = vunpack.c.h.b16 %v111
    %v155 = vunpack.c.l.b16 %v112
    %v156 = vunpack.c.l.b16 %v113
    %v157 = vunpack.c.h.b16 %v113
    %v158 = vunpack.c.l.b16 %v114
    %v159 = vunpack.c.l.b16 %v115
    %v160 = vunpack.c.h.b16 %v115
    %v161 = vunpack.c.l.b16 %v116
    %v162 = vunpack.c.l.b16 %v117
    %v163 = vunpack.c.h.b16 %v117
    %v164 = vunpack.c.l.b16 %v118
    %v165 = vunpack.c.l.b16 %v119
    %v166 = vunpack.c.h.b16 %v119
    %v167 = vunpack.c.l.b16 %v120
    %v168 = vunpack.c.l.b16 %v121
    %v169 = vunpack.c.h.b16 %v121
    %v170 = vunpack.c.l.b16 %v122
    %v171 = vunpack.c.l.b16 %v123
    %v172 = vunpack.c.h.b16 %v123
    %v173 = vunpack.c.l.b16 %v124
    %v174 = vunpack.c.l.b16 %v125
    %v175 = vunpack.c.h.b16 %v125
    %v176 = vunpack.c.l.b16 %v126
    %v177 = vpack.c.b16 %v150, %v147
    %v178 = vpack.c.b16 %v151, %v148
    %v179 = vpack.c.b16 %v152, %v149
    %v180 = vpack.c.b16 %v156, %v153
    %v181 = vpack.c.b16 %v157, %v154
    %v182 = vpack.c.b16 %v158, %v155
    %v183 = vpack.c.b16 %v162, %v159
    %v184 = vpack.c.b16 %v163, %v160
    %v185 = vpack.c.b16 %v164, %v161
    %v186 = vpack.c.b16 %v168, %v165
    %v187 = vpack.c.b16 %v169, %v166
    %v188 = vpack.c.b16 %v170, %v167
    %v189 = vpack.c.b16 %v174, %v171
    %v190 = vpack.c.b16 %v175, %v172
    %v191 = vpack.c.b16 %v176, %v173
    %v208 = vsel %vm91, %v106, 0
    %210 = vmatprep.subr.bf16.mxu0 %v178
    %211 = vmatpush1.bf16.msra.mxu0 %v177
    %212 = vmatprep.subr.bf16.mxu0 %v181
    %213 = vmatpush1.bf16.msra.mxu0 %v180
    %214 = vmatprep.subr.bf16.mxu0 %v184
    %215 = vmatpush1.bf16.msra.mxu0 %v183
    %216 = vmatprep.subr.bf16.mxu0 %v187
    %217 = vmatpush1.bf16.msra.mxu0 %v186
    %218 = vmatprep.subr.bf16.mxu0 %v190
    %219 = vmatpush1.bf16.msra.mxu0 %v189
    %220 = vmatprep.subr.bf16.mxu0 0
    %221 = vmatpush1.bf16.msra.mxu0 0
    %222 = vmatprep.subr.bf16.mxu0 0
    %223 = vmatpush1.bf16.msra.mxu0 0
    %224 = vmatprep.subr.bf16.mxu0 0
    %225 = vmatpush1.bf16.msra.mxu0 0
    %226 = vmatprep.subr.bf16.mxu0 0
    %227 = vmatpush1.bf16.msra.mxu0 0
    %228 = vmatprep.subr.bf16.mxu0 0
    %229 = vmatpush1.bf16.msra.mxu0 0
    %230 = vmatprep.subr.bf16.mxu0 0
    %231 = vmatpush1.bf16.msra.mxu0 0
    %232 = vmatprep.subr.bf16.mxu0 0
    %233 = vmatpush1.bf16.msra.mxu0 0
    %234 = vmatprep.subr.bf16.mxu0 0
    %235 = vmatpush1.bf16.msra.mxu0 0
    %236 = vmatprep.subr.bf16.mxu0 0
    %237 = vmatpush1.bf16.msra.mxu0 0
    %238 = vmatprep.subr.bf16.mxu0 0
    %239 = vmatpush1.bf16.msra.mxu0 0
    %240 = vmatprep.subr.bf16.mxu0 0
    %241 = vmatpush1.bf16.msra.mxu0 0
    %242 = vmatprep.mubr.bf16.mxu0 0
    %243 = vmatmul.mubr.bf16.gmra.mrb[0].mxu0 %v208
    %v244 = vpop.f32.mrb[0].mxu0
    %v245 = vadd.f32 0.0, %v244
    %v246 = vpop.f32.mrb[0].mxu0
    %v247 = vadd.f32 0.0, %v246
    %v248 = vpop.f32.mrb[0].mxu0
    %v249 = vpop.f32.mrb[0].mxu0
    %250 = vdwg.mxu0
    %251 = vmatprep.subr.bf16.mxu0 0
    %252 = vmatpush1.bf16.msra.mxu0 %v179
    %253 = vmatprep.subr.bf16.mxu0 0
    %254 = vmatpush1.bf16.msra.mxu0 %v182
    %255 = vmatprep.subr.bf16.mxu0 0
    %256 = vmatpush1.bf16.msra.mxu0 %v185
    %257 = vmatprep.subr.bf16.mxu0 0
    %258 = vmatpush1.bf16.msra.mxu0 %v188
    %259 = vmatprep.subr.bf16.mxu0 0
    %260 = vmatpush1.bf16.msra.mxu0 %v191
    %261 = vmatprep.subr.bf16.mxu0 0
    %262 = vmatpush1.bf16.msra.mxu0 0
    %263 = vmatprep.subr.bf16.mxu0 0
    %264 = vmatpush1.bf16.msra.mxu0 0
    %265 = vmatprep.subr.bf16.mxu0 0
    %266 = vmatpush1.bf16.msra.mxu0 0
    %267 = vmatprep.subr.bf16.mxu0 0
    %268 = vmatpush1.bf16.msra.mxu0 0
    %269 = vmatprep.subr.bf16.mxu0 0
    %270 = vmatpush1.bf16.msra.mxu0 0
    %271 = vmatprep.subr.bf16.mxu0 0
    %272 = vmatpush1.bf16.msra.mxu0 0
    %273 = vmatprep.subr.bf16.mxu0 0
    %274 = vmatpush1.bf16.msra.mxu0 0
    %275 = vmatprep.subr.bf16.mxu0 0
    %276 = vmatpush1.bf16.msra.mxu0 0
    %277 = vmatprep.subr.bf16.mxu0 0
    %278 = vmatpush1.bf16.msra.mxu0 0
    %279 = vmatprep.subr.bf16.mxu0 0
    %280 = vmatpush1.bf16.msra.mxu0 0
    %281 = vmatprep.subr.bf16.mxu0 0
    %282 = vmatpush1.bf16.msra.mxu0 0
    %283 = vmatprep.mubr.bf16.mxu0 0
    %284 = vmatmul.mubr.bf16.gmra.mrb[0].mxu0 %v208
    %v285 = vpop.f32.mrb[0].mxu0
    %v286 = vadd.f32 0.0, %v285
    %v287 = vpop.f32.mrb[0].mxu0
    %v288 = vpop.f32.mrb[0].mxu0
    %v289 = vpop.f32.mrb[0].mxu0
    %290 = vdwg.mxu0
    %v291 = vpack.c.bf16 %v245, %v245
    %v292 = vpack.c.bf16 %v247, %v247
    %v293 = vpack.c.bf16 %v286, %v286
    %v294 = vld [vmem:[%s2] sm:$0x7]
    %v296 = vlaneseq
    %v297 = vshrl.u32 %v296, 7
    %v298 = vsub.s32 0, %v297
    %v299 = vrot.slane %v294, %v298
    %v300 = vlaneseq
    %v301 = vshrl.u32 %v300, 7
    %v302 = vsub.s32 1, %v301
    %v303 = vrot.slane %v294, %v302
    %v304 = vlaneseq
    %v305 = vshrl.u32 %v304, 7
    %v306 = vsub.s32 2, %v305
    %v307 = vrot.slane %v294, %v306
    %v311 = vpack.c.bf16 %v299, %v299
    %v312 = vpack.c.bf16 %v303, %v303
    %v313 = vpack.c.bf16 %v307, %v307
    %v315 = vpack.i.b16 %v311, %v311
    %v317 = vlaneseq
    %v318 = vshrl.u32 %v317, 7
    %v319 = vsub.s32 0, %v318
    %v320 = vrot.slane %v315, %v319
    %v322 = vpack.i.b16 %v312, %v312
    %v324 = vlaneseq
    %v325 = vshrl.u32 %v324, 7
    %v326 = vsub.s32 0, %v325
    %v327 = vrot.slane %v322, %v326
    %v329 = vpack.i.b16 %v313, %v313
    %v331 = vlaneseq
    %v332 = vshrl.u32 %v331, 7
    %v333 = vsub.s32 0, %v332
    %v334 = vrot.slane %v329, %v333
    %v335 = vadd.bf16 %v291, %v320
    %v336 = vadd.bf16 %v292, %v327
    %v337 = vadd.bf16 %v293, %v334
    %v338 = vmax.bf16 %v335, 0
    %v339 = vmax.bf16 %v336, 0
    %v340 = vmax.bf16 %v337, 0
    %v341 = vld [vmem:[#allocation4] sm:$0xff]
    %v342 = vld [vmem:[#allocation4 + $0x8] sm:$0xff]
    %v343 = vld [vmem:[#allocation4 + $0x10] sm:$0xff]
    %v344 = vld [vmem:[#allocation4 + $0x18] sm:$0xff]
    %v345 = vld [vmem:[#allocation4 + $0x20] sm:$0xff]
    %v346 = vld [vmem:[#allocation4 + $0x28] sm:$0xff]
    %v347 = vld [vmem:[#allocation4 + $0x30] sm:$0xff]
    %v348 = vld [vmem:[#allocation4 + $0x38] sm:$0xff]
    %v349 = vld [vmem:[#allocation4 + $0x40] sm:$0xff]
    %v350 = vld [vmem:[#allocation4 + $0x48] sm:$0xff]
    %v351 = vld [vmem:[#allocation4 + $0x50] sm:$0xff]
    %v352 = vld [vmem:[#allocation4 + $0x58] sm:$0xff]
    %v353 = vld [vmem:[#allocation4 + $0x60] sm:$0xff]
    %v354 = vld [vmem:[#allocation4 + $0x68] sm:$0xff]
    %v355 = vld [vmem:[#allocation4 + $0x70] sm:$0xff]
    %v356 = vld [vmem:[#allocation4 + $0x78] sm:$0xff]
    %v357 = vld [vmem:[#allocation4 + $0x80] sm:$0xff]
    %v358 = vld [vmem:[#allocation4 + $0x88] sm:$0xff]
    %v359 = vld [vmem:[#allocation4 + $0x90] sm:$0xff]
    %v360 = vld [vmem:[#allocation4 + $0x98] sm:$0xff]
    %v361 = vld [vmem:[#allocation4 + $0xa0] sm:$0xff]
    %v362 = vld [vmem:[#allocation4 + $0xa8] sm:$0xff]
    %v363 = vld [vmem:[#allocation4 + $0xb0] sm:$0xff]
    %v364 = vld [vmem:[#allocation4 + $0xb8] sm:$0xff]
    %v365 = vld [vmem:[#allocation4 + $0xc0] sm:$0xff]
    %v366 = vld [vmem:[#allocation4 + $0xc8] sm:$0xff]
    %v367 = vld [vmem:[#allocation4 + $0xd0] sm:$0xff]
    %v368 = vld [vmem:[#allocation4 + $0xd8] sm:$0xff]
    %v369 = vld [vmem:[#allocation4 + $0xe0] sm:$0xff]
    %v370 = vld [vmem:[#allocation4 + $0xe8] sm:$0xff]
    %v371 = vld [vmem:[#allocation4 + $0xf0] sm:$0xff]
    %v372 = vld [vmem:[#allocation4 + $0xf8] sm:$0xff]
    %v373 = vld [vmem:[#allocation4 + $0x100] sm:$0xff]
    %v374 = vld [vmem:[#allocation4 + $0x108] sm:$0xff]
    %v375 = vld [vmem:[#allocation4 + $0x110] sm:$0xff]
    %v376 = vld [vmem:[#allocation4 + $0x118] sm:$0xff]
    %v377 = vld [vmem:[#allocation4 + $0x120] sm:$0xff]
    %v378 = vld [vmem:[#allocation4 + $0x128] sm:$0xff]
    %v379 = vld [vmem:[#allocation4 + $0x130] sm:$0xff]
    %v380 = vld [vmem:[#allocation4 + $0x138] sm:$0xff]
    %v381 = vld [vmem:[#allocation4 + $0x140] sm:$0xff]
    %v382 = vld [vmem:[#allocation4 + $0x148] sm:$0xff]
    %v383 = vld [vmem:[#allocation4 + $0x150] sm:$0xff]
    %v384 = vld [vmem:[#allocation4 + $0x158] sm:$0xff]
    %v385 = vld [vmem:[#allocation4 + $0x160] sm:$0xff]
    %v386 = vld [vmem:[#allocation4 + $0x168] sm:$0xff]
    %v387 = vld [vmem:[#allocation4 + $0x170] sm:$0xff]
    %v388 = vld [vmem:[#allocation4 + $0x178] sm:$0xff]
    %v389 = vld [vmem:[#allocation4 + $0x180] sm:$0xff]
    %v390 = vld [vmem:[#allocation4 + $0x188] sm:$0xff]
    %v391 = vld [vmem:[#allocation4 + $0x190] sm:$0xff]
    %v392 = vld [vmem:[#allocation4 + $0x198] sm:$0xff]
    %v393 = vld [vmem:[#allocation4 + $0x1a0] sm:$0xff]
    %v394 = vld [vmem:[#allocation4 + $0x1a8] sm:$0xff]
    %v395 = vld [vmem:[#allocation4 + $0x1b0] sm:$0xff]
    %v396 = vld [vmem:[#allocation4 + $0x1b8] sm:$0xff]
    %v397 = vld [vmem:[#allocation4 + $0x1c0] sm:$0xff]
    %v398 = vld [vmem:[#allocation4 + $0x1c8] sm:$0xff]
    %v399 = vld [vmem:[#allocation4 + $0x1d0] sm:$0xff]
    %v400 = vld [vmem:[#allocation4 + $0x1d8] sm:$0xff]
    %v401 = vld [vmem:[#allocation4 + $0x1e0] sm:$0xff]
    %v402 = vld [vmem:[#allocation4 + $0x1e8] sm:$0xff]
    %v403 = vld [vmem:[#allocation4 + $0x1f0] sm:$0xff]
    %v404 = vld [vmem:[#allocation4 + $0x1f8] sm:$0xff]
    %v405 = vld [vmem:[#allocation4 + $0x200] sm:$0xff]
    %v406 = vld [vmem:[#allocation4 + $0x208] sm:$0xff]
    %v407 = vld [vmem:[#allocation4 + $0x210] sm:$0xff]
    %v408 = vld [vmem:[#allocation4 + $0x218] sm:$0xff]
    %v409 = vld [vmem:[#allocation4 + $0x220] sm:$0xff]
    %v410 = vld [vmem:[#allocation4 + $0x228] sm:$0xff]
    %v411 = vld [vmem:[#allocation4 + $0x230] sm:$0xff]
    %v412 = vld [vmem:[#allocation4 + $0x238] sm:$0xff]
    %v413 = vld [vmem:[#allocation4 + $0x240] sm:$0xff]
    %v414 = vld [vmem:[#allocation4 + $0x248] sm:$0xff]
    %v415 = vld [vmem:[#allocation4 + $0x250] sm:$0xff]
    %v416 = vld [vmem:[#allocation4 + $0x258] sm:$0xff]
    %v417 = vld [vmem:[#allocation4 + $0x260] sm:$0xff]
    %v418 = vld [vmem:[#allocation4 + $0x268] sm:$0xff]
    %v419 = vld [vmem:[#allocation4 + $0x270] sm:$0xff]
    %v420 = vld [vmem:[#allocation4 + $0x278] sm:$0xff]
    %v421 = vld [vmem:[#allocation4 + $0x280] sm:$0xff]
    %v422 = vld [vmem:[#allocation4 + $0x288] sm:$0xff]
    %v423 = vld [vmem:[#allocation4 + $0x290] sm:$0xff]
    %v424 = vld [vmem:[#allocation4 + $0x298] sm:$0xff]
    %v425 = vld [vmem:[#allocation4 + $0x2a0] sm:$0xff]
    %v426 = vld [vmem:[#allocation4 + $0x2a8] sm:$0xff]
    %v427 = vld [vmem:[#allocation4 + $0x2b0] sm:$0xff]
    %v428 = vld [vmem:[#allocation4 + $0x2b8] sm:$0xff]
    %v429 = vld [vmem:[#allocation4 + $0x2c0] sm:$0xff]
    %v430 = vld [vmem:[#allocation4 + $0x2c8] sm:$0xff]
    %v431 = vld [vmem:[#allocation4 + $0x2d0] sm:$0xff]
    %v432 = vld [vmem:[#allocation4 + $0x2d8] sm:$0xff]
    %v433 = vld [vmem:[#allocation4 + $0x2e0] sm:$0xff]
    %v434 = vld [vmem:[#allocation4 + $0x2e8] sm:$0xff]
    %v435 = vld [vmem:[#allocation4 + $0x2f0] sm:$0xff]
    %v436 = vld [vmem:[#allocation4 + $0x2f8] sm:$0xff]
    %v533 = vunpack.c.l.b16 %v341
    %v534 = vunpack.c.h.b16 %v341
    %v535 = vunpack.c.l.b16 %v342
    %v536 = vunpack.c.h.b16 %v342
    %v537 = vunpack.c.l.b16 %v343
    %v538 = vunpack.c.h.b16 %v343
    %v539 = vunpack.c.l.b16 %v344
    %v540 = vunpack.c.h.b16 %v344
    %v541 = vunpack.c.l.b16 %v345
    %v542 = vunpack.c.h.b16 %v345
    %v543 = vunpack.c.l.b16 %v346
    %v544 = vunpack.c.h.b16 %v346
    %v545 = vunpack.c.l.b16 %v347
    %v546 = vunpack.c.h.b16 %v347
    %v547 = vunpack.c.l.b16 %v348
    %v548 = vunpack.c.h.b16 %v348
    %v549 = vunpack.c.l.b16 %v349
    %v550 = vunpack.c.h.b16 %v349
    %v551 = vunpack.c.l.b16 %v350
    %v552 = vunpack.c.h.b16 %v350
    %v553 = vunpack.c.l.b16 %v351
    %v554 = vunpack.c.h.b16 %v351
    %v555 = vunpack.c.l.b16 %v352
    %v556 = vunpack.c.h.b16 %v352
    %v557 = vunpack.c.l.b16 %v353
    %v558 = vunpack.c.h.b16 %v353
    %v559 = vunpack.c.l.b16 %v354
    %v560 = vunpack.c.h.b16 %v354
    %v561 = vunpack.c.l.b16 %v355
    %v562 = vunpack.c.h.b16 %v355
    %v563 = vunpack.c.l.b16 %v356
    %v564 = vunpack.c.h.b16 %v356
    %v565 = vunpack.c.l.b16 %v357
    %v566 = vunpack.c.h.b16 %v357
    %v567 = vunpack.c.l.b16 %v358
    %v568 = vunpack.c.h.b16 %v358
    %v569 = vunpack.c.l.b16 %v359
    %v570 = vunpack.c.h.b16 %v359
    %v571 = vunpack.c.l.b16 %v360
    %v572 = vunpack.c.h.b16 %v360
    %v573 = vunpack.c.l.b16 %v361
    %v574 = vunpack.c.h.b16 %v361
    %v575 = vunpack.c.l.b16 %v362
    %v576 = vunpack.c.h.b16 %v362
    %v577 = vunpack.c.l.b16 %v363
    %v578 = vunpack.c.h.b16 %v363
    %v579 = vunpack.c.l.b16 %v364
    %v580 = vunpack.c.h.b16 %v364
    %v581 = vunpack.c.l.b16 %v365
    %v582 = vunpack.c.h.b16 %v365
    %v583 = vunpack.c.l.b16 %v366
    %v584 = vunpack.c.h.b16 %v366
    %v585 = vunpack.c.l.b16 %v367
    %v586 = vunpack.c.h.b16 %v367
    %v587 = vunpack.c.l.b16 %v368
    %v588 = vunpack.c.h.b16 %v368
    %v589 = vunpack.c.l.b16 %v369
    %v590 = vunpack.c.h.b16 %v369
    %v591 = vunpack.c.l.b16 %v370
    %v592 = vunpack.c.h.b16 %v370
    %v593 = vunpack.c.l.b16 %v371
    %v594 = vunpack.c.h.b16 %v371
    %v595 = vunpack.c.l.b16 %v372
    %v596 = vunpack.c.h.b16 %v372
    %v597 = vunpack.c.l.b16 %v373
    %v598 = vunpack.c.h.b16 %v373
    %v599 = vunpack.c.l.b16 %v374
    %v600 = vunpack.c.h.b16 %v374
    %v601 = vunpack.c.l.b16 %v375
    %v602 = vunpack.c.h.b16 %v375
    %v603 = vunpack.c.l.b16 %v376
    %v604 = vunpack.c.h.b16 %v376
    %v605 = vunpack.c.l.b16 %v377
    %v606 = vunpack.c.h.b16 %v377
    %v607 = vunpack.c.l.b16 %v378
    %v608 = vunpack.c.h.b16 %v378
    %v609 = vunpack.c.l.b16 %v379
    %v610 = vunpack.c.h.b16 %v379
    %v611 = vunpack.c.l.b16 %v380
    %v612 = vunpack.c.h.b16 %v380
    %v613 = vunpack.c.l.b16 %v381
    %v614 = vunpack.c.h.b16 %v381
    %v615 = vunpack.c.l.b16 %v382
    %v616 = vunpack.c.h.b16 %v382
    %v617 = vunpack.c.l.b16 %v383
    %v618 = vunpack.c.h.b16 %v383
    %v619 = vunpack.c.l.b16 %v384
    %v620 = vunpack.c.h.b16 %v384
    %v621 = vunpack.c.l.b16 %v385
    %v622 = vunpack.c.h.b16 %v385
    %v623 = vunpack.c.l.b16 %v386
    %v624 = vunpack.c.h.b16 %v386
    %v625 = vunpack.c.l.b16 %v387
    %v626 = vunpack.c.h.b16 %v387
    %v627 = vunpack.c.l.b16 %v388
    %v628 = vunpack.c.h.b16 %v388
    %v629 = vunpack.c.l.b16 %v389
    %v630 = vunpack.c.h.b16 %v389
    %v631 = vunpack.c.l.b16 %v390
    %v632 = vunpack.c.h.b16 %v390
    %v633 = vunpack.c.l.b16 %v391
    %v634 = vunpack.c.h.b16 %v391
    %v635 = vunpack.c.l.b16 %v392
    %v636 = vunpack.c.h.b16 %v392
    %v637 = vunpack.c.l.b16 %v393
    %v638 = vunpack.c.h.b16 %v393
    %v639 = vunpack.c.l.b16 %v394
    %v640 = vunpack.c.h.b16 %v394
    %v641 = vunpack.c.l.b16 %v395
    %v642 = vunpack.c.h.b16 %v395
    %v643 = vunpack.c.l.b16 %v396
    %v644 = vunpack.c.h.b16 %v396
    %v645 = vunpack.c.l.b16 %v397
    %v646 = vunpack.c.h.b16 %v397
    %v647 = vunpack.c.l.b16 %v398
    %v648 = vunpack.c.h.b16 %v398
    %v649 = vunpack.c.l.b16 %v399
    %v650 = vunpack.c.h.b16 %v399
    %v651 = vunpack.c.l.b16 %v400
    %v652 = vunpack.c.h.b16 %v400
    %v653 = vunpack.c.l.b16 %v401
    %v654 = vunpack.c.h.b16 %v401
    %v655 = vunpack.c.l.b16 %v402
    %v656 = vunpack.c.h.b16 %v402
    %v657 = vunpack.c.l.b16 %v403
    %v658 = vunpack.c.h.b16 %v403
    %v659 = vunpack.c.l.b16 %v404
    %v660 = vunpack.c.h.b16 %v404
    %v661 = vunpack.c.l.b16 %v405
    %v662 = vunpack.c.h.b16 %v405
    %v663 = vunpack.c.l.b16 %v406
    %v664 = vunpack.c.h.b16 %v406
    %v665 = vunpack.c.l.b16 %v407
    %v666 = vunpack.c.h.b16 %v407
    %v667 = vunpack.c.l.b16 %v408
    %v668 = vunpack.c.h.b16 %v408
    %v669 = vunpack.c.l.b16 %v409
    %v670 = vunpack.c.h.b16 %v409
    %v671 = vunpack.c.l.b16 %v410
    %v672 = vunpack.c.h.b16 %v410
    %v673 = vunpack.c.l.b16 %v411
    %v674 = vunpack.c.h.b16 %v411
    %v675 = vunpack.c.l.b16 %v412
    %v676 = vunpack.c.h.b16 %v412
    %v677 = vunpack.c.l.b16 %v413
    %v678 = vunpack.c.h.b16 %v413
    %v679 = vunpack.c.l.b16 %v414
    %v680 = vunpack.c.h.b16 %v414
    %v681 = vunpack.c.l.b16 %v415
    %v682 = vunpack.c.h.b16 %v415
    %v683 = vunpack.c.l.b16 %v416
    %v684 = vunpack.c.h.b16 %v416
    %v685 = vunpack.c.l.b16 %v417
    %v686 = vunpack.c.h.b16 %v417
    %v687 = vunpack.c.l.b16 %v418
    %v688 = vunpack.c.h.b16 %v418
    %v689 = vunpack.c.l.b16 %v419
    %v690 = vunpack.c.h.b16 %v419
    %v691 = vunpack.c.l.b16 %v420
    %v692 = vunpack.c.h.b16 %v420
    %v693 = vunpack.c.l.b16 %v421
    %v694 = vunpack.c.h.b16 %v421
    %v695 = vunpack.c.l.b16 %v422
    %v696 = vunpack.c.h.b16 %v422
    %v697 = vunpack.c.l.b16 %v423
    %v698 = vunpack.c.h.b16 %v423
    %v699 = vunpack.c.l.b16 %v424
    %v700 = vunpack.c.h.b16 %v424
    %v701 = vunpack.c.l.b16 %v425
    %v702 = vunpack.c.h.b16 %v425
    %v703 = vunpack.c.l.b16 %v426
    %v704 = vunpack.c.h.b16 %v426
    %v705 = vunpack.c.l.b16 %v427
    %v706 = vunpack.c.h.b16 %v427
    %v707 = vunpack.c.l.b16 %v428
    %v708 = vunpack.c.h.b16 %v428
    %v709 = vunpack.c.l.b16 %v429
    %v710 = vunpack.c.h.b16 %v429
    %v711 = vunpack.c.l.b16 %v430
    %v712 = vunpack.c.h.b16 %v430
    %v713 = vunpack.c.l.b16 %v431
    %v714 = vunpack.c.h.b16 %v431
    %v715 = vunpack.c.l.b16 %v432
    %v716 = vunpack.c.h.b16 %v432
    %v717 = vunpack.c.l.b16 %v433
    %v718 = vunpack.c.h.b16 %v433
    %v719 = vunpack.c.l.b16 %v434
    %v720 = vunpack.c.h.b16 %v434
    %v721 = vunpack.c.l.b16 %v435
    %v722 = vunpack.c.h.b16 %v435
    %v723 = vunpack.c.l.b16 %v436
    %v724 = vunpack.c.h.b16 %v436
    %v725 = vpack.c.b16 %v537, %v533
    %v726 = vpack.c.b16 %v538, %v534
    %v727 = vpack.c.b16 %v539, %v535
    %v728 = vpack.c.b16 %v540, %v536
    %v729 = vpack.c.b16 %v545, %v541
    %v730 = vpack.c.b16 %v546, %v542
    %v731 = vpack.c.b16 %v547, %v543
    %v732 = vpack.c.b16 %v548, %v544
    %v733 = vpack.c.b16 %v553, %v549
    %v734 = vpack.c.b16 %v554, %v550
    %v735 = vpack.c.b16 %v555, %v551
    %v736 = vpack.c.b16 %v556, %v552
    %v737 = vpack.c.b16 %v561, %v557
    %v738 = vpack.c.b16 %v562, %v558
    %v739 = vpack.c.b16 %v563, %v559
    %v740 = vpack.c.b16 %v564, %v560
    %v741 = vpack.c.b16 %v569, %v565
    %v742 = vpack.c.b16 %v570, %v566
    %v743 = vpack.c.b16 %v571, %v567
    %v744 = vpack.c.b16 %v572, %v568
    %v745 = vpack.c.b16 %v577, %v573
    %v746 = vpack.c.b16 %v578, %v574
    %v747 = vpack.c.b16 %v579, %v575
    %v748 = vpack.c.b16 %v580, %v576
    %v749 = vpack.c.b16 %v585, %v581
    %v750 = vpack.c.b16 %v586, %v582
    %v751 = vpack.c.b16 %v587, %v583
    %v752 = vpack.c.b16 %v588, %v584
    %v753 = vpack.c.b16 %v593, %v589
    %v754 = vpack.c.b16 %v594, %v590
    %v755 = vpack.c.b16 %v595, %v591
    %v756 = vpack.c.b16 %v596, %v592
    %v757 = vpack.c.b16 %v601, %v597
    %v758 = vpack.c.b16 %v602, %v598
    %v759 = vpack.c.b16 %v603, %v599
    %v760 = vpack.c.b16 %v604, %v600
    %v761 = vpack.c.b16 %v609, %v605
    %v762 = vpack.c.b16 %v610, %v606
    %v763 = vpack.c.b16 %v611, %v607
    %v764 = vpack.c.b16 %v612, %v608
    %v765 = vpack.c.b16 %v617, %v613
    %v766 = vpack.c.b16 %v618, %v614
    %v767 = vpack.c.b16 %v619, %v615
    %v768 = vpack.c.b16 %v620, %v616
    %v769 = vpack.c.b16 %v625, %v621
    %v770 = vpack.c.b16 %v626, %v622
    %v771 = vpack.c.b16 %v627, %v623
    %v772 = vpack.c.b16 %v628, %v624
    %v773 = vpack.c.b16 %v633, %v629
    %v774 = vpack.c.b16 %v634, %v630
    %v775 = vpack.c.b16 %v635, %v631
    %v776 = vpack.c.b16 %v636, %v632
    %v777 = vpack.c.b16 %v641, %v637
    %v778 = vpack.c.b16 %v642, %v638
    %v779 = vpack.c.b16 %v643, %v639
    %v780 = vpack.c.b16 %v644, %v640
    %v781 = vpack.c.b16 %v649, %v645
    %v782 = vpack.c.b16 %v650, %v646
    %v783 = vpack.c.b16 %v651, %v647
    %v784 = vpack.c.b16 %v652, %v648
    %v785 = vpack.c.b16 %v657, %v653
    %v786 = vpack.c.b16 %v658, %v654
    %v787 = vpack.c.b16 %v659, %v655
    %v788 = vpack.c.b16 %v660, %v656
    %v789 = vpack.c.b16 %v665, %v661
    %v790 = vpack.c.b16 %v666, %v662
    %v791 = vpack.c.b16 %v667, %v663
    %v792 = vpack.c.b16 %v668, %v664
    %v793 = vpack.c.b16 %v673, %v669
    %v794 = vpack.c.b16 %v674, %v670
    %v795 = vpack.c.b16 %v675, %v671
    %v796 = vpack.c.b16 %v676, %v672
    %v797 = vpack.c.b16 %v681, %v677
    %v798 = vpack.c.b16 %v682, %v678
    %v799 = vpack.c.b16 %v683, %v679
    %v800 = vpack.c.b16 %v684, %v680
    %v801 = vpack.c.b16 %v689, %v685
    %v802 = vpack.c.b16 %v690, %v686
    %v803 = vpack.c.b16 %v691, %v687
    %v804 = vpack.c.b16 %v692, %v688
    %v805 = vpack.c.b16 %v697, %v693
    %v806 = vpack.c.b16 %v698, %v694
    %v807 = vpack.c.b16 %v699, %v695
    %v808 = vpack.c.b16 %v700, %v696
    %v809 = vpack.c.b16 %v705, %v701
    %v810 = vpack.c.b16 %v706, %v702
    %v811 = vpack.c.b16 %v707, %v703
    %v812 = vpack.c.b16 %v708, %v704
    %v813 = vpack.c.b16 %v713, %v709
    %v814 = vpack.c.b16 %v714, %v710
    %v815 = vpack.c.b16 %v715, %v711
    %v816 = vpack.c.b16 %v716, %v712
    %v817 = vpack.c.b16 %v721, %v717
    %v818 = vpack.c.b16 %v722, %v718
    %v819 = vpack.c.b16 %v723, %v719
    %v820 = vpack.c.b16 %v724, %v720
    %917 = vmatprep.subr.bf16.mxu0 %v726
    %918 = vmatpush1.bf16.msra.mxu0 %v725
    %919 = vmatprep.subr.bf16.mxu0 %v730
    %920 = vmatpush1.bf16.msra.mxu0 %v729
    %921 = vmatprep.subr.bf16.mxu0 %v734
    %922 = vmatpush1.bf16.msra.mxu0 %v733
    %923 = vmatprep.subr.bf16.mxu0 %v738
    %924 = vmatpush1.bf16.msra.mxu0 %v737
    %925 = vmatprep.subr.bf16.mxu0 %v742
    %926 = vmatpush1.bf16.msra.mxu0 %v741
    %927 = vmatprep.subr.bf16.mxu0 %v746
    %928 = vmatpush1.bf16.msra.mxu0 %v745
    %929 = vmatprep.subr.bf16.mxu0 %v750
    %930 = vmatpush1.bf16.msra.mxu0 %v749
    %931 = vmatprep.subr.bf16.mxu0 %v754
    %932 = vmatpush1.bf16.msra.mxu0 %v753
    %933 = vmatprep.subr.bf16.mxu0 %v758
    %934 = vmatpush1.bf16.msra.mxu0 %v757
    %935 = vmatprep.subr.bf16.mxu0 %v762
    %936 = vmatpush1.bf16.msra.mxu0 %v761
    %937 = vmatprep.subr.bf16.mxu0 %v766
    %938 = vmatpush1.bf16.msra.mxu0 %v765
    %939 = vmatprep.subr.bf16.mxu0 %v770
    %940 = vmatpush1.bf16.msra.mxu0 %v769
    %941 = vmatprep.subr.bf16.mxu0 %v774
    %942 = vmatpush1.bf16.msra.mxu0 %v773
    %943 = vmatprep.subr.bf16.mxu0 %v778
    %944 = vmatpush1.bf16.msra.mxu0 %v777
    %945 = vmatprep.subr.bf16.mxu0 %v782
    %946 = vmatpush1.bf16.msra.mxu0 %v781
    %947 = vmatprep.subr.bf16.mxu0 %v786
    %948 = vmatpush1.bf16.msra.mxu0 %v785
    %949 = vmatprep.mubr.bf16.mxu0 %v339
    %950 = vmatmul.mubr.bf16.gmra.mrb[0].mxu0 %v338
    %v951 = vpop.f32.mrb[0].mxu0
    %v952 = vadd.f32 0.0, %v951
    %v953 = vpop.f32.mrb[0].mxu0
    %v954 = vadd.f32 0.0, %v953
    %v955 = vpop.f32.mrb[0].mxu0
    %v956 = vpop.f32.mrb[0].mxu0
    %957 = vdwg.mxu0
    %958 = vmatprep.subr.bf16.mxu0 %v790
    %959 = vmatpush1.bf16.msra.mxu0 %v789
    %960 = vmatprep.subr.bf16.mxu0 %v794
    %961 = vmatpush1.bf16.msra.mxu0 %v793
    %962 = vmatprep.subr.bf16.mxu0 %v798
    %963 = vmatpush1.bf16.msra.mxu0 %v797
    %964 = vmatprep.subr.bf16.mxu0 %v802
    %965 = vmatpush1.bf16.msra.mxu0 %v801
    %966 = vmatprep.subr.bf16.mxu0 %v806
    %967 = vmatpush1.bf16.msra.mxu0 %v805
    %968 = vmatprep.subr.bf16.mxu0 %v810
    %969 = vmatpush1.bf16.msra.mxu0 %v809
    %970 = vmatprep.subr.bf16.mxu0 %v814
    %971 = vmatpush1.bf16.msra.mxu0 %v813
    %972 = vmatprep.subr.bf16.mxu0 %v818
    %973 = vmatpush1.bf16.msra.mxu0 %v817
    %974 = vmatprep.subr.bf16.mxu0 0
    %975 = vmatpush1.bf16.msra.mxu0 0
    %976 = vmatprep.subr.bf16.mxu0 0
    %977 = vmatpush1.bf16.msra.mxu0 0
    %978 = vmatprep.subr.bf16.mxu0 0
    %979 = vmatpush1.bf16.msra.mxu0 0
    %980 = vmatprep.subr.bf16.mxu0 0
    %981 = vmatpush1.bf16.msra.mxu0 0
    %982 = vmatprep.subr.bf16.mxu0 0
    %983 = vmatpush1.bf16.msra.mxu0 0
    %984 = vmatprep.subr.bf16.mxu0 0
    %985 = vmatpush1.bf16.msra.mxu0 0
    %986 = vmatprep.subr.bf16.mxu0 0
    %987 = vmatpush1.bf16.msra.mxu0 0
    %988 = vmatprep.subr.bf16.mxu0 0
    %989 = vmatpush1.bf16.msra.mxu0 0
    %990 = vmatprep.mubr.bf16.mxu0 0
    %991 = vmatmul.mubr.bf16.gmra.mrb[0].mxu0 %v340
    %v992 = vpop.f32.mrb[0].mxu0
    %v993 = vadd.f32 %v952, %v992
    %v994 = vpop.f32.mrb[0].mxu0
    %v995 = vadd.f32 %v954, %v994
    %v996 = vpop.f32.mrb[0].mxu0
    %v997 = vpop.f32.mrb[0].mxu0
    %998 = vdwg.mxu0
    %999 = vmatprep.subr.bf16.mxu0 %v728
    %1000 = vmatpush1.bf16.msra.mxu0 %v727
    %1001 = vmatprep.subr.bf16.mxu0 %v732
    %1002 = vmatpush1.bf16.msra.mxu0 %v731
    %1003 = vmatprep.subr.bf16.mxu0 %v736
    %1004 = vmatpush1.bf16.msra.mxu0 %v735
    %1005 = vmatprep.subr.bf16.mxu0 %v740
    %1006 = vmatpush1.bf16.msra.mxu0 %v739
    %1007 = vmatprep.subr.bf16.mxu0 %v744
    %1008 = vmatpush1.bf16.msra.mxu0 %v743
    %1009 = vmatprep.subr.bf16.mxu0 %v748
    %1010 = vmatpush1.bf16.msra.mxu0 %v747
    %1011 = vmatprep.subr.bf16.mxu0 %v752
    %1012 = vmatpush1.bf16.msra.mxu0 %v751
    %1013 = vmatprep.subr.bf16.mxu0 %v756
    %1014 = vmatpush1.bf16.msra.mxu0 %v755
    %1015 = vmatprep.subr.bf16.mxu0 %v760
    %1016 = vmatpush1.bf16.msra.mxu0 %v759
    %1017 = vmatprep.subr.bf16.mxu0 %v764
    %1018 = vmatpush1.bf16.msra.mxu0 %v763
    %1019 = vmatprep.subr.bf16.mxu0 %v768
    %1020 = vmatpush1.bf16.msra.mxu0 %v767
    %1021 = vmatprep.subr.bf16.mxu0 %v772
    %1022 = vmatpush1.bf16.msra.mxu0 %v771
    %1023 = vmatprep.subr.bf16.mxu0 %v776
    %1024 = vmatpush1.bf16.msra.mxu0 %v775
    %1025 = vmatprep.subr.bf16.mxu0 %v780
    %1026 = vmatpush1.bf16.msra.mxu0 %v779
    %1027 = vmatprep.subr.bf16.mxu0 %v784
    %1028 = vmatpush1.bf16.msra.mxu0 %v783
    %1029 = vmatprep.subr.bf16.mxu0 %v788
    %1030 = vmatpush1.bf16.msra.mxu0 %v787
    %1031 = vmatprep.mubr.bf16.mxu0 %v339
    %1032 = vmatmul.mubr.bf16.gmra.mrb[0].mxu0 %v338
    %v1033 = vpop.f32.mrb[0].mxu0
    %v1034 = vadd.f32 0.0, %v1033
    %v1035 = vpop.f32.mrb[0].mxu0
    %v1036 = vadd.f32 0.0, %v1035
    %v1037 = vpop.f32.mrb[0].mxu0
    %v1038 = vpop.f32.mrb[0].mxu0
    %1039 = vdwg.mxu0
    %1040 = vmatprep.subr.bf16.mxu0 %v792
    %1041 = vmatpush1.bf16.msra.mxu0 %v791
    %1042 = vmatprep.subr.bf16.mxu0 %v796
    %1043 = vmatpush1.bf16.msra.mxu0 %v795
    %1044 = vmatprep.subr.bf16.mxu0 %v800
    %1045 = vmatpush1.bf16.msra.mxu0 %v799
    %1046 = vmatprep.subr.bf16.mxu0 %v804
    %1047 = vmatpush1.bf16.msra.mxu0 %v803
    %1048 = vmatprep.subr.bf16.mxu0 %v808
    %1049 = vmatpush1.bf16.msra.mxu0 %v807
    %1050 = vmatprep.subr.bf16.mxu0 %v812
    %1051 = vmatpush1.bf16.msra.mxu0 %v811
    %1052 = vmatprep.subr.bf16.mxu0 %v816
    %1053 = vmatpush1.bf16.msra.mxu0 %v815
    %1054 = vmatprep.subr.bf16.mxu0 %v820
    %1055 = vmatpush1.bf16.msra.mxu0 %v819
    %1056 = vmatprep.subr.bf16.mxu0 0
    %1057 = vmatpush1.bf16.msra.mxu0 0
    %1058 = vmatprep.subr.bf16.mxu0 0
    %1059 = vmatpush1.bf16.msra.mxu0 0
    %1060 = vmatprep.subr.bf16.mxu0 0
    %1061 = vmatpush1.bf16.msra.mxu0 0
    %1062 = vmatprep.subr.bf16.mxu0 0
    %1063 = vmatpush1.bf16.msra.mxu0 0
    %1064 = vmatprep.subr.bf16.mxu0 0
    %1065 = vmatpush1.bf16.msra.mxu0 0
    %1066 = vmatprep.subr.bf16.mxu0 0
    %1067 = vmatpush1.bf16.msra.mxu0 0
    %1068 = vmatprep.subr.bf16.mxu0 0
    %1069 = vmatpush1.bf16.msra.mxu0 0
    %1070 = vmatprep.subr.bf16.mxu0 0
    %1071 = vmatpush1.bf16.msra.mxu0 0
    %1072 = vmatprep.mubr.bf16.mxu0 0
    %1073 = vmatmul.mubr.bf16.gmra.mrb[0].mxu0 %v340
    %v1074 = vpop.f32.mrb[0].mxu0
    %v1075 = vadd.f32 %v1034, %v1074
    %v1076 = vpop.f32.mrb[0].mxu0
    %v1077 = vadd.f32 %v1036, %v1076
    %v1078 = vpop.f32.mrb[0].mxu0
    %v1079 = vpop.f32.mrb[0].mxu0
    %1080 = vdwg.mxu0
    %v1081 = vpack.c.bf16 %v993, %v993
    %v1082 = vpack.c.bf16 %v995, %v995
    %v1083 = vpack.c.bf16 %v1075, %v1075
    %v1084 = vpack.c.bf16 %v1077, %v1077
    %v1085 = vld [vmem:[%s4] sm:$0xf]
    %v1087 = vlaneseq
    %v1088 = vshrl.u32 %v1087, 7
    %v1089 = vsub.s32 0, %v1088
    %v1090 = vrot.slane %v1085, %v1089
    %v1091 = vlaneseq
    %v1092 = vshrl.u32 %v1091, 7
    %v1093 = vsub.s32 1, %v1092
    %v1094 = vrot.slane %v1085, %v1093
    %v1095 = vlaneseq
    %v1096 = vshrl.u32 %v1095, 7
    %v1097 = vsub.s32 2, %v1096
    %v1098 = vrot.slane %v1085, %v1097
    %v1099 = vlaneseq
    %v1100 = vshrl.u32 %v1099, 7
    %v1101 = vsub.s32 3, %v1100
    %v1102 = vrot.slane %v1085, %v1101
    %v1107 = vpack.c.bf16 %v1090, %v1090
    %v1108 = vpack.c.bf16 %v1094, %v1094
    %v1109 = vpack.c.bf16 %v1098, %v1098
    %v1110 = vpack.c.bf16 %v1102, %v1102
    %v1112 = vpack.i.b16 %v1107, %v1107
    %v1114 = vlaneseq
    %v1115 = vshrl.u32 %v1114, 7
    %v1116 = vsub.s32 0, %v1115
    %v1117 = vrot.slane %v1112, %v1116
    %v1119 = vpack.i.b16 %v1108, %v1108
    %v1121 = vlaneseq
    %v1122 = vshrl.u32 %v1121, 7
    %v1123 = vsub.s32 0, %v1122
    %v1124 = vrot.slane %v1119, %v1123
    %v1126 = vpack.i.b16 %v1109, %v1109
    %v1128 = vlaneseq
    %v1129 = vshrl.u32 %v1128, 7
    %v1130 = vsub.s32 0, %v1129
    %v1131 = vrot.slane %v1126, %v1130
    %v1133 = vpack.i.b16 %v1110, %v1110
    %v1135 = vlaneseq
    %v1136 = vshrl.u32 %v1135, 7
    %v1137 = vsub.s32 0, %v1136
    %v1138 = vrot.slane %v1133, %v1137
    %v1139 = vadd.bf16 %v1081, %v1117
    %v1140 = vadd.bf16 %v1082, %v1124
    %v1141 = vadd.bf16 %v1083, %v1131
    %v1142 = vadd.bf16 %v1084, %v1138
    %v1143 = vmax.bf16 %v1139, 0
    %v1144 = vmax.bf16 %v1140, 0
    %v1145 = vmax.bf16 %v1141, 0
    %v1146 = vmax.bf16 %v1142, 0
    %v1147 = vld [vmem:[#allocation6] sm:$0xff]
    %v1148 = vld [vmem:[#allocation6 + $0x8] sm:$0xf]
    %v1149 = vld [vmem:[#allocation6 + $0xc] sm:$0xff]
    %v1150 = vld [vmem:[#allocation6 + $0x14] sm:$0xf]
    %v1151 = vld [vmem:[#allocation6 + $0x18] sm:$0xff]
    %v1152 = vld [vmem:[#allocation6 + $0x20] sm:$0xf]
    %v1153 = vld [vmem:[#allocation6 + $0x24] sm:$0xff]
    %v1154 = vld [vmem:[#allocation6 + $0x2c] sm:$0xf]
    %v1155 = vld [vmem:[#allocation6 + $0x30] sm:$0xff]
    %v1156 = vld [vmem:[#allocation6 + $0x38] sm:$0xf]
    %v1157 = vld [vmem:[#allocation6 + $0x3c] sm:$0xff]
    %v1158 = vld [vmem:[#allocation6 + $0x44] sm:$0xf]
    %v1159 = vld [vmem:[#allocation6 + $0x48] sm:$0xff]
    %v1160 = vld [vmem:[#allocation6 + $0x50] sm:$0xf]
    %v1161 = vld [vmem:[#allocation6 + $0x54] sm:$0xff]
    %v1162 = vld [vmem:[#allocation6 + $0x5c] sm:$0xf]
    %v1163 = vld [vmem:[#allocation6 + $0x60] sm:$0xff]
    %v1164 = vld [vmem:[#allocation6 + $0x68] sm:$0xf]
    %v1165 = vld [vmem:[#allocation6 + $0x6c] sm:$0xff]
    %v1166 = vld [vmem:[#allocation6 + $0x74] sm:$0xf]
    %v1167 = vld [vmem:[#allocation6 + $0x78] sm:$0xff]
    %v1168 = vld [vmem:[#allocation6 + $0x80] sm:$0xf]
    %v1169 = vld [vmem:[#allocation6 + $0x84] sm:$0xff]
    %v1170 = vld [vmem:[#allocation6 + $0x8c] sm:$0xf]
    %v1171 = vld [vmem:[#allocation6 + $0x90] sm:$0xff]
    %v1172 = vld [vmem:[#allocation6 + $0x98] sm:$0xf]
    %v1173 = vld [vmem:[#allocation6 + $0x9c] sm:$0xff]
    %v1174 = vld [vmem:[#allocation6 + $0xa4] sm:$0xf]
    %v1175 = vld [vmem:[#allocation6 + $0xa8] sm:$0xff]
    %v1176 = vld [vmem:[#allocation6 + $0xb0] sm:$0xf]
    %v1177 = vld [vmem:[#allocation6 + $0xb4] sm:$0xff]
    %v1178 = vld [vmem:[#allocation6 + $0xbc] sm:$0xf]
    %v1179 = vld [vmem:[#allocation6 + $0xc0] sm:$0xff]
    %v1180 = vld [vmem:[#allocation6 + $0xc8] sm:$0xf]
    %v1181 = vld [vmem:[#allocation6 + $0xcc] sm:$0xff]
    %v1182 = vld [vmem:[#allocation6 + $0xd4] sm:$0xf]
    %v1183 = vld [vmem:[#allocation6 + $0xd8] sm:$0xff]
    %v1184 = vld [vmem:[#allocation6 + $0xe0] sm:$0xf]
    %v1185 = vld [vmem:[#allocation6 + $0xe4] sm:$0xff]
    %v1186 = vld [vmem:[#allocation6 + $0xec] sm:$0xf]
    %v1187 = vld [vmem:[#allocation6 + $0xf0] sm:$0xff]
    %v1188 = vld [vmem:[#allocation6 + $0xf8] sm:$0xf]
    %v1189 = vld [vmem:[#allocation6 + $0xfc] sm:$0xff]
    %v1190 = vld [vmem:[#allocation6 + $0x104] sm:$0xf]
    %v1191 = vld [vmem:[#allocation6 + $0x108] sm:$0xff]
    %v1192 = vld [vmem:[#allocation6 + $0x110] sm:$0xf]
    %v1193 = vld [vmem:[#allocation6 + $0x114] sm:$0xff]
    %v1194 = vld [vmem:[#allocation6 + $0x11c] sm:$0xf]
    %v1195 = vld [vmem:[#allocation6 + $0x120] sm:$0xff]
    %v1196 = vld [vmem:[#allocation6 + $0x128] sm:$0xf]
    %v1197 = vld [vmem:[#allocation6 + $0x12c] sm:$0xff]
    %v1198 = vld [vmem:[#allocation6 + $0x134] sm:$0xf]
    %v1199 = vld [vmem:[#allocation6 + $0x138] sm:$0xff]
    %v1200 = vld [vmem:[#allocation6 + $0x140] sm:$0xf]
    %v1201 = vld [vmem:[#allocation6 + $0x144] sm:$0xff]
    %v1202 = vld [vmem:[#allocation6 + $0x14c] sm:$0xf]
    %v1203 = vld [vmem:[#allocation6 + $0x150] sm:$0xff]
    %v1204 = vld [vmem:[#allocation6 + $0x158] sm:$0xf]
    %v1205 = vld [vmem:[#allocation6 + $0x15c] sm:$0xff]
    %v1206 = vld [vmem:[#allocation6 + $0x164] sm:$0xf]
    %v1207 = vld [vmem:[#allocation6 + $0x168] sm:$0xff]
    %v1208 = vld [vmem:[#allocation6 + $0x170] sm:$0xf]
    %v1209 = vld [vmem:[#allocation6 + $0x174] sm:$0xff]
    %v1210 = vld [vmem:[#allocation6 + $0x17c] sm:$0xf]
    %v1211 = vld [vmem:[#allocation6 + $0x180] sm:$0xff]
    %v1212 = vld [vmem:[#allocation6 + $0x188] sm:$0xf]
    %v1213 = vld [vmem:[#allocation6 + $0x18c] sm:$0xff]
    %v1214 = vld [vmem:[#allocation6 + $0x194] sm:$0xf]
    %v1215 = vld [vmem:[#allocation6 + $0x198] sm:$0xff]
    %v1216 = vld [vmem:[#allocation6 + $0x1a0] sm:$0xf]
    %v1217 = vld [vmem:[#allocation6 + $0x1a4] sm:$0xff]
    %v1218 = vld [vmem:[#allocation6 + $0x1ac] sm:$0xf]
    %v1219 = vld [vmem:[#allocation6 + $0x1b0] sm:$0xff]
    %v1220 = vld [vmem:[#allocation6 + $0x1b8] sm:$0xf]
    %v1221 = vld [vmem:[#allocation6 + $0x1bc] sm:$0xff]
    %v1222 = vld [vmem:[#allocation6 + $0x1c4] sm:$0xf]
    %v1223 = vld [vmem:[#allocation6 + $0x1c8] sm:$0xff]
    %v1224 = vld [vmem:[#allocation6 + $0x1d0] sm:$0xf]
    %v1225 = vld [vmem:[#allocation6 + $0x1d4] sm:$0xff]
    %v1226 = vld [vmem:[#allocation6 + $0x1dc] sm:$0xf]
    %v1227 = vld [vmem:[#allocation6 + $0x1e0] sm:$0xff]
    %v1228 = vld [vmem:[#allocation6 + $0x1e8] sm:$0xf]
    %v1229 = vld [vmem:[#allocation6 + $0x1ec] sm:$0xff]
    %v1230 = vld [vmem:[#allocation6 + $0x1f4] sm:$0xf]
    %v1231 = vld [vmem:[#allocation6 + $0x1f8] sm:$0xff]
    %v1232 = vld [vmem:[#allocation6 + $0x200] sm:$0xf]
    %v1233 = vld [vmem:[#allocation6 + $0x204] sm:$0xff]
    %v1234 = vld [vmem:[#allocation6 + $0x20c] sm:$0xf]
    %v1235 = vld [vmem:[#allocation6 + $0x210] sm:$0xff]
    %v1236 = vld [vmem:[#allocation6 + $0x218] sm:$0xf]
    %v1237 = vld [vmem:[#allocation6 + $0x21c] sm:$0xff]
    %v1238 = vld [vmem:[#allocation6 + $0x224] sm:$0xf]
    %v1239 = vld [vmem:[#allocation6 + $0x228] sm:$0xff]
    %v1240 = vld [vmem:[#allocation6 + $0x230] sm:$0xf]
    %v1241 = vld [vmem:[#allocation6 + $0x234] sm:$0xff]
    %v1242 = vld [vmem:[#allocation6 + $0x23c] sm:$0xf]
    %v1243 = vld [vmem:[#allocation6 + $0x240] sm:$0xff]
    %v1244 = vld [vmem:[#allocation6 + $0x248] sm:$0xf]
    %v1245 = vld [vmem:[#allocation6 + $0x24c] sm:$0xff]
    %v1246 = vld [vmem:[#allocation6 + $0x254] sm:$0xf]
    %v1247 = vld [vmem:[#allocation6 + $0x258] sm:$0xff]
    %v1248 = vld [vmem:[#allocation6 + $0x260] sm:$0xf]
    %v1249 = vld [vmem:[#allocation6 + $0x264] sm:$0xff]
    %v1250 = vld [vmem:[#allocation6 + $0x26c] sm:$0xf]
    %v1251 = vld [vmem:[#allocation6 + $0x270] sm:$0xff]
    %v1252 = vld [vmem:[#allocation6 + $0x278] sm:$0xf]
    %v1253 = vld [vmem:[#allocation6 + $0x27c] sm:$0xff]
    %v1254 = vld [vmem:[#allocation6 + $0x284] sm:$0xf]
    %v1255 = vld [vmem:[#allocation6 + $0x288] sm:$0xff]
    %v1256 = vld [vmem:[#allocation6 + $0x290] sm:$0xf]
    %v1257 = vld [vmem:[#allocation6 + $0x294] sm:$0xff]
    %v1258 = vld [vmem:[#allocation6 + $0x29c] sm:$0xf]
    %v1259 = vld [vmem:[#allocation6 + $0x2a0] sm:$0xff]
    %v1260 = vld [vmem:[#allocation6 + $0x2a8] sm:$0xf]
    %v1261 = vld [vmem:[#allocation6 + $0x2ac] sm:$0xff]
    %v1262 = vld [vmem:[#allocation6 + $0x2b4] sm:$0xf]
    %v1263 = vld [vmem:[#allocation6 + $0x2b8] sm:$0xff]
    %v1264 = vld [vmem:[#allocation6 + $0x2c0] sm:$0xf]
    %v1265 = vld [vmem:[#allocation6 + $0x2c4] sm:$0xff]
    %v1266 = vld [vmem:[#allocation6 + $0x2cc] sm:$0xf]
    %v1267 = vld [vmem:[#allocation6 + $0x2d0] sm:$0xff]
    %v1268 = vld [vmem:[#allocation6 + $0x2d8] sm:$0xf]
    %v1269 = vld [vmem:[#allocation6 + $0x2dc] sm:$0xff]
    %v1270 = vld [vmem:[#allocation6 + $0x2e4] sm:$0xf]
    %v1271 = vld [vmem:[#allocation6 + $0x2e8] sm:$0xff]
    %v1272 = vld [vmem:[#allocation6 + $0x2f0] sm:$0xf]
    %v1273 = vld [vmem:[#allocation6 + $0x2f4] sm:$0xff]
    %v1274 = vld [vmem:[#allocation6 + $0x2fc] sm:$0xf]
    %v1403 = vunpack.c.l.b16 %v1147
    %v1404 = vunpack.c.h.b16 %v1147
    %v1405 = vunpack.c.l.b16 %v1148
    %v1406 = vunpack.c.l.b16 %v1149
    %v1407 = vunpack.c.h.b16 %v1149
    %v1408 = vunpack.c.l.b16 %v1150
    %v1409 = vunpack.c.l.b16 %v1151
    %v1410 = vunpack.c.h.b16 %v1151
    %v1411 = vunpack.c.l.b16 %v1152
    %v1412 = vunpack.c.l.b16 %v1153
    %v1413 = vunpack.c.h.b16 %v1153
    %v1414 = vunpack.c.l.b16 %v1154
    %v1415 = vunpack.c.l.b16 %v1155
    %v1416 = vunpack.c.h.b16 %v1155
    %v1417 = vunpack.c.l.b16 %v1156
    %v1418 = vunpack.c.l.b16 %v1157
    %v1419 = vunpack.c.h.b16 %v1157
    %v1420 = vunpack.c.l.b16 %v1158
    %v1421 = vunpack.c.l.b16 %v1159
    %v1422 = vunpack.c.h.b16 %v1159
    %v1423 = vunpack.c.l.b16 %v1160
    %v1424 = vunpack.c.l.b16 %v1161
    %v1425 = vunpack.c.h.b16 %v1161
    %v1426 = vunpack.c.l.b16 %v1162
    %v1427 = vunpack.c.l.b16 %v1163
    %v1428 = vunpack.c.h.b16 %v1163
    %v1429 = vunpack.c.l.b16 %v1164
    %v1430 = vunpack.c.l.b16 %v1165
    %v1431 = vunpack.c.h.b16 %v1165
    %v1432 = vunpack.c.l.b16 %v1166
    %v1433 = vunpack.c.l.b16 %v1167
    %v1434 = vunpack.c.h.b16 %v1167
    %v1435 = vunpack.c.l.b16 %v1168
    %v1436 = vunpack.c.l.b16 %v1169
    %v1437 = vunpack.c.h.b16 %v1169
    %v1438 = vunpack.c.l.b16 %v1170
    %v1439 = vunpack.c.l.b16 %v1171
    %v1440 = vunpack.c.h.b16 %v1171
    %v1441 = vunpack.c.l.b16 %v1172
    %v1442 = vunpack.c.l.b16 %v1173
    %v1443 = vunpack.c.h.b16 %v1173
    %v1444 = vunpack.c.l.b16 %v1174
    %v1445 = vunpack.c.l.b16 %v1175
    %v1446 = vunpack.c.h.b16 %v1175
    %v1447 = vunpack.c.l.b16 %v1176
    %v1448 = vunpack.c.l.b16 %v1177
    %v1449 = vunpack.c.h.b16 %v1177
    %v1450 = vunpack.c.l.b16 %v1178
    %v1451 = vunpack.c.l.b16 %v1179
    %v1452 = vunpack.c.h.b16 %v1179
    %v1453 = vunpack.c.l.b16 %v1180
    %v1454 = vunpack.c.l.b16 %v1181
    %v1455 = vunpack.c.h.b16 %v1181
    %v1456 = vunpack.c.l.b16 %v1182
    %v1457 = vunpack.c.l.b16 %v1183
    %v1458 = vunpack.c.h.b16 %v1183
    %v1459 = vunpack.c.l.b16 %v1184
    %v1460 = vunpack.c.l.b16 %v1185
    %v1461 = vunpack.c.h.b16 %v1185
    %v1462 = vunpack.c.l.b16 %v1186
    %v1463 = vunpack.c.l.b16 %v1187
    %v1464 = vunpack.c.h.b16 %v1187
    %v1465 = vunpack.c.l.b16 %v1188
    %v1466 = vunpack.c.l.b16 %v1189
    %v1467 = vunpack.c.h.b16 %v1189
    %v1468 = vunpack.c.l.b16 %v1190
    %v1469 = vunpack.c.l.b16 %v1191
    %v1470 = vunpack.c.h.b16 %v1191
    %v1471 = vunpack.c.l.b16 %v1192
    %v1472 = vunpack.c.l.b16 %v1193
    %v1473 = vunpack.c.h.b16 %v1193
    %v1474 = vunpack.c.l.b16 %v1194
    %v1475 = vunpack.c.l.b16 %v1195
    %v1476 = vunpack.c.h.b16 %v1195
    %v1477 = vunpack.c.l.b16 %v1196
    %v1478 = vunpack.c.l.b16 %v1197
    %v1479 = vunpack.c.h.b16 %v1197
    %v1480 = vunpack.c.l.b16 %v1198
    %v1481 = vunpack.c.l.b16 %v1199
    %v1482 = vunpack.c.h.b16 %v1199
    %v1483 = vunpack.c.l.b16 %v1200
    %v1484 = vunpack.c.l.b16 %v1201
    %v1485 = vunpack.c.h.b16 %v1201
    %v1486 = vunpack.c.l.b16 %v1202
    %v1487 = vunpack.c.l.b16 %v1203
    %v1488 = vunpack.c.h.b16 %v1203
    %v1489 = vunpack.c.l.b16 %v1204
    %v1490 = vunpack.c.l.b16 %v1205
    %v1491 = vunpack.c.h.b16 %v1205
    %v1492 = vunpack.c.l.b16 %v1206
    %v1493 = vunpack.c.l.b16 %v1207
    %v1494 = vunpack.c.h.b16 %v1207
    %v1495 = vunpack.c.l.b16 %v1208
    %v1496 = vunpack.c.l.b16 %v1209
    %v1497 = vunpack.c.h.b16 %v1209
    %v1498 = vunpack.c.l.b16 %v1210
    %v1499 = vunpack.c.l.b16 %v1211
    %v1500 = vunpack.c.h.b16 %v1211
    %v1501 = vunpack.c.l.b16 %v1212
    %v1502 = vunpack.c.l.b16 %v1213
    %v1503 = vunpack.c.h.b16 %v1213
    %v1504 = vunpack.c.l.b16 %v1214
    %v1505 = vunpack.c.l.b16 %v1215
    %v1506 = vunpack.c.h.b16 %v1215
    %v1507 = vunpack.c.l.b16 %v1216
    %v1508 = vunpack.c.l.b16 %v1217
    %v1509 = vunpack.c.h.b16 %v1217
    %v1510 = vunpack.c.l.b16 %v1218
    %v1511 = vunpack.c.l.b16 %v1219
    %v1512 = vunpack.c.h.b16 %v1219
    %v1513 = vunpack.c.l.b16 %v1220
    %v1514 = vunpack.c.l.b16 %v1221
    %v1515 = vunpack.c.h.b16 %v1221
    %v1516 = vunpack.c.l.b16 %v1222
    %v1517 = vunpack.c.l.b16 %v1223
    %v1518 = vunpack.c.h.b16 %v1223
    %v1519 = vunpack.c.l.b16 %v1224
    %v1520 = vunpack.c.l.b16 %v1225
    %v1521 = vunpack.c.h.b16 %v1225
    %v1522 = vunpack.c.l.b16 %v1226
    %v1523 = vunpack.c.l.b16 %v1227
    %v1524 = vunpack.c.h.b16 %v1227
    %v1525 = vunpack.c.l.b16 %v1228
    %v1526 = vunpack.c.l.b16 %v1229
    %v1527 = vunpack.c.h.b16 %v1229
    %v1528 = vunpack.c.l.b16 %v1230
    %v1529 = vunpack.c.l.b16 %v1231
    %v1530 = vunpack.c.h.b16 %v1231
    %v1531 = vunpack.c.l.b16 %v1232
    %v1532 = vunpack.c.l.b16 %v1233
    %v1533 = vunpack.c.h.b16 %v1233
    %v1534 = vunpack.c.l.b16 %v1234
    %v1535 = vunpack.c.l.b16 %v1235
    %v1536 = vunpack.c.h.b16 %v1235
    %v1537 = vunpack.c.l.b16 %v1236
    %v1538 = vunpack.c.l.b16 %v1237
    %v1539 = vunpack.c.h.b16 %v1237
    %v1540 = vunpack.c.l.b16 %v1238
    %v1541 = vunpack.c.l.b16 %v1239
    %v1542 = vunpack.c.h.b16 %v1239
    %v1543 = vunpack.c.l.b16 %v1240
    %v1544 = vunpack.c.l.b16 %v1241
    %v1545 = vunpack.c.h.b16 %v1241
    %v1546 = vunpack.c.l.b16 %v1242
    %v1547 = vunpack.c.l.b16 %v1243
    %v1548 = vunpack.c.h.b16 %v1243
    %v1549 = vunpack.c.l.b16 %v1244
    %v1550 = vunpack.c.l.b16 %v1245
    %v1551 = vunpack.c.h.b16 %v1245
    %v1552 = vunpack.c.l.b16 %v1246
    %v1553 = vunpack.c.l.b16 %v1247
    %v1554 = vunpack.c.h.b16 %v1247
    %v1555 = vunpack.c.l.b16 %v1248
    %v1556 = vunpack.c.l.b16 %v1249
    %v1557 = vunpack.c.h.b16 %v1249
    %v1558 = vunpack.c.l.b16 %v1250
    %v1559 = vunpack.c.l.b16 %v1251
    %v1560 = vunpack.c.h.b16 %v1251
    %v1561 = vunpack.c.l.b16 %v1252
    %v1562 = vunpack.c.l.b16 %v1253
    %v1563 = vunpack.c.h.b16 %v1253
    %v1564 = vunpack.c.l.b16 %v1254
    %v1565 = vunpack.c.l.b16 %v1255
    %v1566 = vunpack.c.h.b16 %v1255
    %v1567 = vunpack.c.l.b16 %v1256
    %v1568 = vunpack.c.l.b16 %v1257
    %v1569 = vunpack.c.h.b16 %v1257
    %v1570 = vunpack.c.l.b16 %v1258
    %v1571 = vunpack.c.l.b16 %v1259
    %v1572 = vunpack.c.h.b16 %v1259
    %v1573 = vunpack.c.l.b16 %v1260
    %v1574 = vunpack.c.l.b16 %v1261
    %v1575 = vunpack.c.h.b16 %v1261
    %v1576 = vunpack.c.l.b16 %v1262
    %v1577 = vunpack.c.l.b16 %v1263
    %v1578 = vunpack.c.h.b16 %v1263
    %v1579 = vunpack.c.l.b16 %v1264
    %v1580 = vunpack.c.l.b16 %v1265
    %v1581 = vunpack.c.h.b16 %v1265
    %v1582 = vunpack.c.l.b16 %v1266
    %v1583 = vunpack.c.l.b16 %v1267
    %v1584 = vunpack.c.h.b16 %v1267
    %v1585 = vunpack.c.l.b16 %v1268
    %v1586 = vunpack.c.l.b16 %v1269
    %v1587 = vunpack.c.h.b16 %v1269
    %v1588 = vunpack.c.l.b16 %v1270
    %v1589 = vunpack.c.l.b16 %v1271
    %v1590 = vunpack.c.h.b16 %v1271
    %v1591 = vunpack.c.l.b16 %v1272
    %v1592 = vunpack.c.l.b16 %v1273
    %v1593 = vunpack.c.h.b16 %v1273
    %v1594 = vunpack.c.l.b16 %v1274
    %v1595 = vpack.c.b16 %v1406, %v1403
    %v1596 = vpack.c.b16 %v1407, %v1404
    %v1597 = vpack.c.b16 %v1408, %v1405
    %v1598 = vpack.c.b16 %v1412, %v1409
    %v1599 = vpack.c.b16 %v1413, %v1410
    %v1600 = vpack.c.b16 %v1414, %v1411
    %v1601 = vpack.c.b16 %v1418, %v1415
    %v1602 = vpack.c.b16 %v1419, %v1416
    %v1603 = vpack.c.b16 %v1420, %v1417
    %v1604 = vpack.c.b16 %v1424, %v1421
    %v1605 = vpack.c.b16 %v1425, %v1422
    %v1606 = vpack.c.b16 %v1426, %v1423
    %v1607 = vpack.c.b16 %v1430, %v1427
    %v1608 = vpack.c.b16 %v1431, %v1428
    %v1609 = vpack.c.b16 %v1432, %v1429
    %v1610 = vpack.c.b16 %v1436, %v1433
    %v1611 = vpack.c.b16 %v1437, %v1434
    %v1612 = vpack.c.b16 %v1438, %v1435
    %v1613 = vpack.c.b16 %v1442, %v1439
    %v1614 = vpack.c.b16 %v1443, %v1440
    %v1615 = vpack.c.b16 %v1444, %v1441
    %v1616 = vpack.c.b16 %v1448, %v1445
    %v1617 = vpack.c.b16 %v1449, %v1446
    %v1618 = vpack.c.b16 %v1450, %v1447
    %v1619 = vpack.c.b16 %v1454, %v1451
    %v1620 = vpack.c.b16 %v1455, %v1452
    %v1621 = vpack.c.b16 %v1456, %v1453
    %v1622 = vpack.c.b16 %v1460, %v1457
    %v1623 = vpack.c.b16 %v1461, %v1458
    %v1624 = vpack.c.b16 %v1462, %v1459
    %v1625 = vpack.c.b16 %v1466, %v1463
    %v1626 = vpack.c.b16 %v1467, %v1464
    %v1627 = vpack.c.b16 %v1468, %v1465
    %v1628 = vpack.c.b16 %v1472, %v1469
    %v1629 = vpack.c.b16 %v1473, %v1470
    %v1630 = vpack.c.b16 %v1474, %v1471
    %v1631 = vpack.c.b16 %v1478, %v1475
    %v1632 = vpack.c.b16 %v1479, %v1476
    %v1633 = vpack.c.b16 %v1480, %v1477
    %v1634 = vpack.c.b16 %v1484, %v1481
    %v1635 = vpack.c.b16 %v1485, %v1482
    %v1636 = vpack.c.b16 %v1486, %v1483
    %v1637 = vpack.c.b16 %v1490, %v1487
    %v1638 = vpack.c.b16 %v1491, %v1488
    %v1639 = vpack.c.b16 %v1492, %v1489
    %v1640 = vpack.c.b16 %v1496, %v1493
    %v1641 = vpack.c.b16 %v1497, %v1494
    %v1642 = vpack.c.b16 %v1498, %v1495
    %v1643 = vpack.c.b16 %v1502, %v1499
    %v1644 = vpack.c.b16 %v1503, %v1500
    %v1645 = vpack.c.b16 %v1504, %v1501
    %v1646 = vpack.c.b16 %v1508, %v1505
    %v1647 = vpack.c.b16 %v1509, %v1506
    %v1648 = vpack.c.b16 %v1510, %v1507
    %v1649 = vpack.c.b16 %v1514, %v1511
    %v1650 = vpack.c.b16 %v1515, %v1512
    %v1651 = vpack.c.b16 %v1516, %v1513
    %v1652 = vpack.c.b16 %v1520, %v1517
    %v1653 = vpack.c.b16 %v1521, %v1518
    %v1654 = vpack.c.b16 %v1522, %v1519
    %v1655 = vpack.c.b16 %v1526, %v1523
    %v1656 = vpack.c.b16 %v1527, %v1524
    %v1657 = vpack.c.b16 %v1528, %v1525
    %v1658 = vpack.c.b16 %v1532, %v1529
    %v1659 = vpack.c.b16 %v1533, %v1530
    %v1660 = vpack.c.b16 %v1534, %v1531
    %v1661 = vpack.c.b16 %v1538, %v1535
    %v1662 = vpack.c.b16 %v1539, %v1536
    %v1663 = vpack.c.b16 %v1540, %v1537
    %v1664 = vpack.c.b16 %v1544, %v1541
    %v1665 = vpack.c.b16 %v1545, %v1542
    %v1666 = vpack.c.b16 %v1546, %v1543
    %v1667 = vpack.c.b16 %v1550, %v1547
    %v1668 = vpack.c.b16 %v1551, %v1548
    %v1669 = vpack.c.b16 %v1552, %v1549
    %v1670 = vpack.c.b16 %v1556, %v1553
    %v1671 = vpack.c.b16 %v1557, %v1554
    %v1672 = vpack.c.b16 %v1558, %v1555
    %v1673 = vpack.c.b16 %v1562, %v1559
    %v1674 = vpack.c.b16 %v1563, %v1560
    %v1675 = vpack.c.b16 %v1564, %v1561
    %v1676 = vpack.c.b16 %v1568, %v1565
    %v1677 = vpack.c.b16 %v1569, %v1566
    %v1678 = vpack.c.b16 %v1570, %v1567
    %v1679 = vpack.c.b16 %v1574, %v1571
    %v1680 = vpack.c.b16 %v1575, %v1572
    %v1681 = vpack.c.b16 %v1576, %v1573
    %v1682 = vpack.c.b16 %v1580, %v1577
    %v1683 = vpack.c.b16 %v1581, %v1578
    %v1684 = vpack.c.b16 %v1582, %v1579
    %v1685 = vpack.c.b16 %v1586, %v1583
    %v1686 = vpack.c.b16 %v1587, %v1584
    %v1687 = vpack.c.b16 %v1588, %v1585
    %v1688 = vpack.c.b16 %v1592, %v1589
    %v1689 = vpack.c.b16 %v1593, %v1590
    %v1690 = vpack.c.b16 %v1594, %v1591
    %1787 = vmatprep.subr.bf16.mxu0 %v1596
    %1788 = vmatpush1.bf16.msra.mxu0 %v1595
    %1789 = vmatprep.subr.bf16.mxu0 %v1599
    %1790 = vmatpush1.bf16.msra.mxu0 %v1598
    %1791 = vmatprep.subr.bf16.mxu0 %v1602
    %1792 = vmatpush1.bf16.msra.mxu0 %v1601
    %1793 = vmatprep.subr.bf16.mxu0 %v1605
    %1794 = vmatpush1.bf16.msra.mxu0 %v1604
    %1795 = vmatprep.subr.bf16.mxu0 %v1608
    %1796 = vmatpush1.bf16.msra.mxu0 %v1607
    %1797 = vmatprep.subr.bf16.mxu0 %v1611
    %1798 = vmatpush1.bf16.msra.mxu0 %v1610
    %1799 = vmatprep.subr.bf16.mxu0 %v1614
    %1800 = vmatpush1.bf16.msra.mxu0 %v1613
    %1801 = vmatprep.subr.bf16.mxu0 %v1617
    %1802 = vmatpush1.bf16.msra.mxu0 %v1616
    %1803 = vmatprep.subr.bf16.mxu0 %v1620
    %1804 = vmatpush1.bf16.msra.mxu0 %v1619
    %1805 = vmatprep.subr.bf16.mxu0 %v1623
    %1806 = vmatpush1.bf16.msra.mxu0 %v1622
    %1807 = vmatprep.subr.bf16.mxu0 %v1626
    %1808 = vmatpush1.bf16.msra.mxu0 %v1625
    %1809 = vmatprep.subr.bf16.mxu0 %v1629
    %1810 = vmatpush1.bf16.msra.mxu0 %v1628
    %1811 = vmatprep.subr.bf16.mxu0 %v1632
    %1812 = vmatpush1.bf16.msra.mxu0 %v1631
    %1813 = vmatprep.subr.bf16.mxu0 %v1635
    %1814 = vmatpush1.bf16.msra.mxu0 %v1634
    %1815 = vmatprep.subr.bf16.mxu0 %v1638
    %1816 = vmatpush1.bf16.msra.mxu0 %v1637
    %1817 = vmatprep.subr.bf16.mxu0 %v1641
    %1818 = vmatpush1.bf16.msra.mxu0 %v1640
    %1819 = vmatprep.mubr.bf16.mxu0 %v1144
    %1820 = vmatmul.mubr.bf16.gmra.mrb[0].mxu0 %v1143
    %v1821 = vpop.f32.mrb[0].mxu0
    %v1822 = vadd.f32 0.0, %v1821
    %v1823 = vpop.f32.mrb[0].mxu0
    %v1824 = vadd.f32 0.0, %v1823
    %v1825 = vpop.f32.mrb[0].mxu0
    %v1826 = vpop.f32.mrb[0].mxu0
    %1827 = vdwg.mxu0
    %1828 = vmatprep.subr.bf16.mxu0 %v1644
    %1829 = vmatpush1.bf16.msra.mxu0 %v1643
    %1830 = vmatprep.subr.bf16.mxu0 %v1647
    %1831 = vmatpush1.bf16.msra.mxu0 %v1646
    %1832 = vmatprep.subr.bf16.mxu0 %v1650
    %1833 = vmatpush1.bf16.msra.mxu0 %v1649
    %1834 = vmatprep.subr.bf16.mxu0 %v1653
    %1835 = vmatpush1.bf16.msra.mxu0 %v1652
    %1836 = vmatprep.subr.bf16.mxu0 %v1656
    %1837 = vmatpush1.bf16.msra.mxu0 %v1655
    %1838 = vmatprep.subr.bf16.mxu0 %v1659
    %1839 = vmatpush1.bf16.msra.mxu0 %v1658
    %1840 = vmatprep.subr.bf16.mxu0 %v1662
    %1841 = vmatpush1.bf16.msra.mxu0 %v1661
    %1842 = vmatprep.subr.bf16.mxu0 %v1665
    %1843 = vmatpush1.bf16.msra.mxu0 %v1664
    %1844 = vmatprep.subr.bf16.mxu0 %v1668
    %1845 = vmatpush1.bf16.msra.mxu0 %v1667
    %1846 = vmatprep.subr.bf16.mxu0 %v1671
    %1847 = vmatpush1.bf16.msra.mxu0 %v1670
    %1848 = vmatprep.subr.bf16.mxu0 %v1674
    %1849 = vmatpush1.bf16.msra.mxu0 %v1673
    %1850 = vmatprep.subr.bf16.mxu0 %v1677
    %1851 = vmatpush1.bf16.msra.mxu0 %v1676
    %1852 = vmatprep.subr.bf16.mxu0 %v1680
    %1853 = vmatpush1.bf16.msra.mxu0 %v1679
    %1854 = vmatprep.subr.bf16.mxu0 %v1683
    %1855 = vmatpush1.bf16.msra.mxu0 %v1682
    %1856 = vmatprep.subr.bf16.mxu0 %v1686
    %1857 = vmatpush1.bf16.msra.mxu0 %v1685
    %1858 = vmatprep.subr.bf16.mxu0 %v1689
    %1859 = vmatpush1.bf16.msra.mxu0 %v1688
    %1860 = vmatprep.mubr.bf16.mxu0 %v1146
    %1861 = vmatmul.mubr.bf16.gmra.mrb[0].mxu0 %v1145
    %v1862 = vpop.f32.mrb[0].mxu0
    %v1863 = vadd.f32 %v1822, %v1862
    %v1864 = vpop.f32.mrb[0].mxu0
    %v1865 = vadd.f32 %v1824, %v1864
    %v1866 = vpop.f32.mrb[0].mxu0
    %v1867 = vpop.f32.mrb[0].mxu0
    %1868 = vdwg.mxu0
    %1869 = vmatprep.subr.bf16.mxu0 0
    %1870 = vmatpush1.bf16.msra.mxu0 %v1597
    %1871 = vmatprep.subr.bf16.mxu0 0
    %1872 = vmatpush1.bf16.msra.mxu0 %v1600
    %1873 = vmatprep.subr.bf16.mxu0 0
    %1874 = vmatpush1.bf16.msra.mxu0 %v1603
    %1875 = vmatprep.subr.bf16.mxu0 0
    %1876 = vmatpush1.bf16.msra.mxu0 %v1606
    %1877 = vmatprep.subr.bf16.mxu0 0
    %1878 = vmatpush1.bf16.msra.mxu0 %v1609
    %1879 = vmatprep.subr.bf16.mxu0 0
    %1880 = vmatpush1.bf16.msra.mxu0 %v1612
    %1881 = vmatprep.subr.bf16.mxu0 0
    %1882 = vmatpush1.bf16.msra.mxu0 %v1615
    %1883 = vmatprep.subr.bf16.mxu0 0
    %1884 = vmatpush1.bf16.msra.mxu0 %v1618
    %1885 = vmatprep.subr.bf16.mxu0 0
    %1886 = vmatpush1.bf16.msra.mxu0 %v1621
    %1887 = vmatprep.subr.bf16.mxu0 0
    %1888 = vmatpush1.bf16.msra.mxu0 %v1624
    %1889 = vmatprep.subr.bf16.mxu0 0
    %1890 = vmatpush1.bf16.msra.mxu0 %v1627
    %1891 = vmatprep.subr.bf16.mxu0 0
    %1892 = vmatpush1.bf16.msra.mxu0 %v1630
    %1893 = vmatprep.subr.bf16.mxu0 0
    %1894 = vmatpush1.bf16.msra.mxu0 %v1633
    %1895 = vmatprep.subr.bf16.mxu0 0
    %1896 = vmatpush1.bf16.msra.mxu0 %v1636
    %1897 = vmatprep.subr.bf16.mxu0 0
    %1898 = vmatpush1.bf16.msra.mxu0 %v1639
    %1899 = vmatprep.subr.bf16.mxu0 0
    %1900 = vmatpush1.bf16.msra.mxu0 %v1642
    %1901 = vmatprep.mubr.bf16.mxu0 %v1144
    %1902 = vmatmul.mubr.bf16.gmra.mrb[0].mxu0 %v1143
    %v1903 = vpop.f32.mrb[0].mxu0
    %v1904 = vadd.f32 0.0, %v1903
    %v1905 = vpop.f32.mrb[0].mxu0
    %v1906 = vpop.f32.mrb[0].mxu0
    %v1907 = vpop.f32.mrb[0].mxu0
    %1908 = vdwg.mxu0
    %1909 = vmatprep.subr.bf16.mxu0 0
    %1910 = vmatpush1.bf16.msra.mxu0 %v1645
    %1911 = vmatprep.subr.bf16.mxu0 0
    %1912 = vmatpush1.bf16.msra.mxu0 %v1648
    %1913 = vmatprep.subr.bf16.mxu0 0
    %1914 = vmatpush1.bf16.msra.mxu0 %v1651
    %1915 = vmatprep.subr.bf16.mxu0 0
    %1916 = vmatpush1.bf16.msra.mxu0 %v1654
    %1917 = vmatprep.subr.bf16.mxu0 0
    %1918 = vmatpush1.bf16.msra.mxu0 %v1657
    %1919 = vmatprep.subr.bf16.mxu0 0
    %1920 = vmatpush1.bf16.msra.mxu0 %v1660
    %1921 = vmatprep.subr.bf16.mxu0 0
    %1922 = vmatpush1.bf16.msra.mxu0 %v1663
    %1923 = vmatprep.subr.bf16.mxu0 0
    %1924 = vmatpush1.bf16.msra.mxu0 %v1666
    %1925 = vmatprep.subr.bf16.mxu0 0
    %1926 = vmatpush1.bf16.msra.mxu0 %v1669
    %1927 = vmatprep.subr.bf16.mxu0 0
    %1928 = vmatpush1.bf16.msra.mxu0 %v1672
    %1929 = vmatprep.subr.bf16.mxu0 0
    %1930 = vmatpush1.bf16.msra.mxu0 %v1675
    %1931 = vmatprep.subr.bf16.mxu0 0
    %1932 = vmatpush1.bf16.msra.mxu0 %v1678
    %1933 = vmatprep.subr.bf16.mxu0 0
    %1934 = vmatpush1.bf16.msra.mxu0 %v1681
    %1935 = vmatprep.subr.bf16.mxu0 0
    %1936 = vmatpush1.bf16.msra.mxu0 %v1684
    %1937 = vmatprep.subr.bf16.mxu0 0
    %1938 = vmatpush1.bf16.msra.mxu0 %v1687
    %1939 = vmatprep.subr.bf16.mxu0 0
    %1940 = vmatpush1.bf16.msra.mxu0 %v1690
    %1941 = vmatprep.mubr.bf16.mxu0 %v1146
    %1942 = vmatmul.mubr.bf16.gmra.mrb[0].mxu0 %v1145
    %v1943 = vpop.f32.mrb[0].mxu0
    %v1944 = vadd.f32 %v1904, %v1943
    %v1945 = vpop.f32.mrb[0].mxu0
    %v1946 = vpop.f32.mrb[0].mxu0
    %v1947 = vpop.f32.mrb[0].mxu0
    %1948 = vdwg.mxu0
    %v1949 = vpack.c.bf16 %v1863, %v1863
    %v1950 = vpack.c.bf16 %v1865, %v1865
    %v1951 = vpack.c.bf16 %v1944, %v1944
    %v1952 = vld [vmem:[%s6] sm:$0x7]
    %v1954 = vlaneseq
    %v1955 = vshrl.u32 %v1954, 7
    %v1956 = vsub.s32 0, %v1955
    %v1957 = vrot.slane %v1952, %v1956
    %v1958 = vlaneseq
    %v1959 = vshrl.u32 %v1958, 7
    %v1960 = vsub.s32 1, %v1959
    %v1961 = vrot.slane %v1952, %v1960
    %v1962 = vlaneseq
    %v1963 = vshrl.u32 %v1962, 7
    %v1964 = vsub.s32 2, %v1963
    %v1965 = vrot.slane %v1952, %v1964
    %v1969 = vpack.c.bf16 %v1957, %v1957
    %v1970 = vpack.c.bf16 %v1961, %v1961
    %v1971 = vpack.c.bf16 %v1965, %v1965
    %v1973 = vpack.i.b16 %v1969, %v1969
    %v1975 = vlaneseq
    %v1976 = vshrl.u32 %v1975, 7
    %v1977 = vsub.s32 0, %v1976
    %v1978 = vrot.slane %v1973, %v1977
    %v1980 = vpack.i.b16 %v1970, %v1970
    %v1982 = vlaneseq
    %v1983 = vshrl.u32 %v1982, 7
    %v1984 = vsub.s32 0, %v1983
    %v1985 = vrot.slane %v1980, %v1984
    %v1987 = vpack.i.b16 %v1971, %v1971
    %v1989 = vlaneseq
    %v1990 = vshrl.u32 %v1989, 7
    %v1991 = vsub.s32 0, %v1990
    %v1992 = vrot.slane %v1987, %v1991
    %v1993 = vadd.bf16 %v1949, %v1978
    %v1994 = vadd.bf16 %v1950, %v1985
    %v1995 = vadd.bf16 %v1951, %v1992
    %v1996 = vmax.bf16 %v1993, 0
    %v1997 = vmax.bf16 %v1994, 0
    %v1998 = vmax.bf16 %v1995, 0
    %v1999 = vld [vmem:[%s7] sm:$0xf]
    %v2000 = vld [vmem:[%s7 + $0x4] sm:$0xf]
    %v2001 = vld [vmem:[%s7 + $0x8] sm:$0xf]
    %v2002 = vld [vmem:[%s7 + $0xc] sm:$0xf]
    %v2003 = vld [vmem:[%s7 + $0x10] sm:$0xf]
    %v2004 = vld [vmem:[%s7 + $0x14] sm:$0xf]
    %v2005 = vld [vmem:[%s7 + $0x18] sm:$0xf]
    %v2006 = vld [vmem:[%s7 + $0x1c] sm:$0xf]
    %v2007 = vld [vmem:[%s7 + $0x20] sm:$0xf]
    %v2008 = vld [vmem:[%s7 + $0x24] sm:$0xf]
    %v2009 = vld [vmem:[%s7 + $0x28] sm:$0xf]
    %v2010 = vld [vmem:[%s7 + $0x2c] sm:$0xf]
    %v2011 = vld [vmem:[%s7 + $0x30] sm:$0xf]
    %v2012 = vld [vmem:[%s7 + $0x34] sm:$0xf]
    %v2013 = vld [vmem:[%s7 + $0x38] sm:$0xf]
    %v2014 = vld [vmem:[%s7 + $0x3c] sm:$0xf]
    %v2015 = vld [vmem:[%s7 + $0x40] sm:$0xf]
    %v2016 = vld [vmem:[%s7 + $0x44] sm:$0xf]
    %v2017 = vld [vmem:[%s7 + $0x48] sm:$0xf]
    %v2018 = vld [vmem:[%s7 + $0x4c] sm:$0xf]
    %v2019 = vld [vmem:[%s7 + $0x50] sm:$0xf]
    %v2020 = vld [vmem:[%s7 + $0x54] sm:$0xf]
    %v2021 = vld [vmem:[%s7 + $0x58] sm:$0xf]
    %v2022 = vld [vmem:[%s7 + $0x5c] sm:$0xf]
    %v2023 = vld [vmem:[%s7 + $0x60] sm:$0xf]
    %v2024 = vld [vmem:[%s7 + $0x64] sm:$0xf]
    %v2025 = vld [vmem:[%s7 + $0x68] sm:$0xf]
    %v2026 = vld [vmem:[%s7 + $0x6c] sm:$0xf]
    %v2027 = vld [vmem:[%s7 + $0x70] sm:$0xf]
    %v2028 = vld [vmem:[%s7 + $0x74] sm:$0xf]
    %v2029 = vld [vmem:[%s7 + $0x78] sm:$0xf]
    %v2030 = vld [vmem:[%s7 + $0x7c] sm:$0xf]
    %v2031 = vld [vmem:[%s7 + $0x80] sm:$0xf]
    %v2032 = vld [vmem:[%s7 + $0x84] sm:$0xf]
    %v2033 = vld [vmem:[%s7 + $0x88] sm:$0xf]
    %v2034 = vld [vmem:[%s7 + $0x8c] sm:$0xf]
    %v2035 = vld [vmem:[%s7 + $0x90] sm:$0xf]
    %v2036 = vld [vmem:[%s7 + $0x94] sm:$0xf]
    %v2037 = vld [vmem:[%s7 + $0x98] sm:$0xf]
    %v2038 = vld [vmem:[%s7 + $0x9c] sm:$0xf]
    %v2039 = vld [vmem:[%s7 + $0xa0] sm:$0xf]
    %v2040 = vld [vmem:[%s7 + $0xa4] sm:$0xf]
    %v2041 = vld [vmem:[%s7 + $0xa8] sm:$0xf]
    %v2042 = vld [vmem:[%s7 + $0xac] sm:$0xf]
    %v2043 = vld [vmem:[%s7 + $0xb0] sm:$0xf]
    %v2044 = vld [vmem:[%s7 + $0xb4] sm:$0xf]
    %v2045 = vld [vmem:[%s7 + $0xb8] sm:$0xf]
    %v2046 = vld [vmem:[%s7 + $0xbc] sm:$0xf]
    %v2047 = vld [vmem:[%s8] sm:$0x1]
    %v2049 = vlaneseq
    %v2050 = vshrl.u32 %v2049, 7
    %v2051 = vsub.s32 0, %v2050
    %v2052 = vrot.slane %v2047, %v2051
    %v2102 = vunpack.c.l.b16 %v1999
    %v2103 = vunpack.c.l.b16 %v2000
    %v2104 = vunpack.c.l.b16 %v2001
    %v2105 = vunpack.c.l.b16 %v2002
    %v2106 = vunpack.c.l.b16 %v2003
    %v2107 = vunpack.c.l.b16 %v2004
    %v2108 = vunpack.c.l.b16 %v2005
    %v2109 = vunpack.c.l.b16 %v2006
    %v2110 = vunpack.c.l.b16 %v2007
    %v2111 = vunpack.c.l.b16 %v2008
    %v2112 = vunpack.c.l.b16 %v2009
    %v2113 = vunpack.c.l.b16 %v2010
    %v2114 = vunpack.c.l.b16 %v2011
    %v2115 = vunpack.c.l.b16 %v2012
    %v2116 = vunpack.c.l.b16 %v2013
    %v2117 = vunpack.c.l.b16 %v2014
    %v2118 = vunpack.c.l.b16 %v2015
    %v2119 = vunpack.c.l.b16 %v2016
    %v2120 = vunpack.c.l.b16 %v2017
    %v2121 = vunpack.c.l.b16 %v2018
    %v2122 = vunpack.c.l.b16 %v2019
    %v2123 = vunpack.c.l.b16 %v2020
    %v2124 = vunpack.c.l.b16 %v2021
    %v2125 = vunpack.c.l.b16 %v2022
    %v2126 = vunpack.c.l.b16 %v2023
    %v2127 = vunpack.c.l.b16 %v2024
    %v2128 = vunpack.c.l.b16 %v2025
    %v2129 = vunpack.c.l.b16 %v2026
    %v2130 = vunpack.c.l.b16 %v2027
    %v2131 = vunpack.c.l.b16 %v2028
    %v2132 = vunpack.c.l.b16 %v2029
    %v2133 = vunpack.c.l.b16 %v2030
    %v2134 = vunpack.c.l.b16 %v2031
    %v2135 = vunpack.c.l.b16 %v2032
    %v2136 = vunpack.c.l.b16 %v2033
    %v2137 = vunpack.c.l.b16 %v2034
    %v2138 = vunpack.c.l.b16 %v2035
    %v2139 = vunpack.c.l.b16 %v2036
    %v2140 = vunpack.c.l.b16 %v2037
    %v2141 = vunpack.c.l.b16 %v2038
    %v2142 = vunpack.c.l.b16 %v2039
    %v2143 = vunpack.c.l.b16 %v2040
    %v2144 = vunpack.c.l.b16 %v2041
    %v2145 = vunpack.c.l.b16 %v2042
    %v2146 = vunpack.c.l.b16 %v2043
    %v2147 = vunpack.c.l.b16 %v2044
    %v2148 = vunpack.c.l.b16 %v2045
    %v2149 = vunpack.c.l.b16 %v2046
    %v2150 = vpack.c.b16 %v2103, %v2102
    %v2151 = vpack.c.b16 %v2105, %v2104
    %v2152 = vpack.c.b16 %v2107, %v2106
    %v2153 = vpack.c.b16 %v2109, %v2108
    %v2154 = vpack.c.b16 %v2111, %v2110
    %v2155 = vpack.c.b16 %v2113, %v2112
    %v2156 = vpack.c.b16 %v2115, %v2114
    %v2157 = vpack.c.b16 %v2117, %v2116
    %v2158 = vpack.c.b16 %v2119, %v2118
    %v2159 = vpack.c.b16 %v2121, %v2120
    %v2160 = vpack.c.b16 %v2123, %v2122
    %v2161 = vpack.c.b16 %v2125, %v2124
    %v2162 = vpack.c.b16 %v2127, %v2126
    %v2163 = vpack.c.b16 %v2129, %v2128
    %v2164 = vpack.c.b16 %v2131, %v2130
    %v2165 = vpack.c.b16 %v2133, %v2132
    %v2166 = vpack.c.b16 %v2135, %v2134
    %v2167 = vpack.c.b16 %v2137, %v2136
    %v2168 = vpack.c.b16 %v2139, %v2138
    %v2169 = vpack.c.b16 %v2141, %v2140
    %v2170 = vpack.c.b16 %v2143, %v2142
    %v2171 = vpack.c.b16 %v2145, %v2144
    %v2172 = vpack.c.b16 %v2147, %v2146
    %v2173 = vpack.c.b16 %v2149, %v2148
    %2198 = vmatprep.subr.bf16.mxu0 0
    %2199 = vmatpush1.bf16.msra.mxu0 %v2150
    %2200 = vmatprep.subr.bf16.mxu0 0
    %2201 = vmatpush1.bf16.msra.mxu0 %v2151
    %2202 = vmatprep.subr.bf16.mxu0 0
    %2203 = vmatpush1.bf16.msra.mxu0 %v2152
    %2204 = vmatprep.subr.bf16.mxu0 0
    %2205 = vmatpush1.bf16.msra.mxu0 %v2153
    %2206 = vmatprep.subr.bf16.mxu0 0
    %2207 = vmatpush1.bf16.msra.mxu0 %v2154
    %2208 = vmatprep.subr.bf16.mxu0 0
    %2209 = vmatpush1.bf16.msra.mxu0 %v2155
    %2210 = vmatprep.subr.bf16.mxu0 0
    %2211 = vmatpush1.bf16.msra.mxu0 %v2156
    %2212 = vmatprep.subr.bf16.mxu0 0
    %2213 = vmatpush1.bf16.msra.mxu0 %v2157
    %2214 = vmatprep.subr.bf16.mxu0 0
    %2215 = vmatpush1.bf16.msra.mxu0 %v2158
    %2216 = vmatprep.subr.bf16.mxu0 0
    %2217 = vmatpush1.bf16.msra.mxu0 %v2159
    %2218 = vmatprep.subr.bf16.mxu0 0
    %2219 = vmatpush1.bf16.msra.mxu0 %v2160
    %2220 = vmatprep.subr.bf16.mxu0 0
    %2221 = vmatpush1.bf16.msra.mxu0 %v2161
    %2222 = vmatprep.subr.bf16.mxu0 0
    %2223 = vmatpush1.bf16.msra.mxu0 %v2162
    %2224 = vmatprep.subr.bf16.mxu0 0
    %2225 = vmatpush1.bf16.msra.mxu0 %v2163
    %2226 = vmatprep.subr.bf16.mxu0 0
    %2227 = vmatpush1.bf16.msra.mxu0 %v2164
    %2228 = vmatprep.subr.bf16.mxu0 0
    %2229 = vmatpush1.bf16.msra.mxu0 %v2165
    %2230 = vmatprep.mubr.bf16.mxu0 %v1997
    %2231 = vmatmul.mubr.bf16.gmra.mrb[0].mxu0 %v1996
    %v2232 = vpop.f32.mrb[0].mxu0
    %v2233 = vadd.f32 %v2052, %v2232
    %v2234 = vpop.f32.mrb[0].mxu0
    %v2235 = vpop.f32.mrb[0].mxu0
    %v2236 = vpop.f32.mrb[0].mxu0
    %2237 = vdwg.mxu0
    %2238 = vmatprep.subr.bf16.mxu0 0
    %2239 = vmatpush1.bf16.msra.mxu0 %v2166
    %2240 = vmatprep.subr.bf16.mxu0 0
    %2241 = vmatpush1.bf16.msra.mxu0 %v2167
    %2242 = vmatprep.subr.bf16.mxu0 0
    %2243 = vmatpush1.bf16.msra.mxu0 %v2168
    %2244 = vmatprep.subr.bf16.mxu0 0
    %2245 = vmatpush1.bf16.msra.mxu0 %v2169
    %2246 = vmatprep.subr.bf16.mxu0 0
    %2247 = vmatpush1.bf16.msra.mxu0 %v2170
    %2248 = vmatprep.subr.bf16.mxu0 0
    %2249 = vmatpush1.bf16.msra.mxu0 %v2171
    %2250 = vmatprep.subr.bf16.mxu0 0
    %2251 = vmatpush1.bf16.msra.mxu0 %v2172
    %2252 = vmatprep.subr.bf16.mxu0 0
    %2253 = vmatpush1.bf16.msra.mxu0 %v2173
    %2254 = vmatprep.subr.bf16.mxu0 0
    %2255 = vmatpush1.bf16.msra.mxu0 0
    %2256 = vmatprep.subr.bf16.mxu0 0
    %2257 = vmatpush1.bf16.msra.mxu0 0
    %2258 = vmatprep.subr.bf16.mxu0 0
    %2259 = vmatpush1.bf16.msra.mxu0 0
    %2260 = vmatprep.subr.bf16.mxu0 0
    %2261 = vmatpush1.bf16.msra.mxu0 0
    %2262 = vmatprep.subr.bf16.mxu0 0
    %2263 = vmatpush1.bf16.msra.mxu0 0
    %2264 = vmatprep.subr.bf16.mxu0 0
    %2265 = vmatpush1.bf16.msra.mxu0 0
    %2266 = vmatprep.subr.bf16.mxu0 0
    %2267 = vmatpush1.bf16.msra.mxu0 0
    %2268 = vmatprep.subr.bf16.mxu0 0
    %2269 = vmatpush1.bf16.msra.mxu0 0
    %2270 = vmatprep.mubr.bf16.mxu0 0
    %2271 = vmatmul.mubr.bf16.gmra.mrb[0].mxu0 %v1998
    %v2272 = vpop.f32.mrb[0].mxu0
    %v2273 = vadd.f32 %v2233, %v2272
    %v2274 = vpop.f32.mrb[0].mxu0
    %v2275 = vpop.f32.mrb[0].mxu0
    %v2276 = vpop.f32.mrb[0].mxu0
    %2277 = vdwg.mxu0
    %vm2278 = vcmask 7168
    %2279 = vst.msk [vmem:[%s9] sm:$0xff] %vm2278, %v2273
    // Predicated region
    $region50: #{xanathor_forward.1} parent=1 // pred_check
      _
    $region51: #{xanathor_forward.1} parent=1 // pred_check_branch
      %2281 = sbr.rel (0) target = $region53
    $region52: #{xanathor_forward.1} parent=1 // pred_region
      _
    $region53: #{xanathor_forward.1} parent=1 // pred_fallthru
      _
    // Predicated region
    $region54: #{xanathor_forward.1} parent=1 // pred_check
      _
    $region55: #{xanathor_forward.1} parent=1 // pred_check_branch
      %2283 = sbr.rel (0) target = $region57
    $region56: #{xanathor_forward.1} parent=1 // pred_region
      _
    $region57: #{xanathor_forward.1} parent=1 // pred_fallthru
      _
    %2284 = vsyncpa [#allocation3], 1
    %2285 = vsyncpa [#allocation5], 1

</llo_original>
